<compile_context>
chip_gen: v5e
topology: v5e:2x2
jax: 0.10.0
libtpu: 0.0.40
codegen_flags: <defaults>
</compile_context>

<pallas_src>
import functools

import jax
import jax.numpy as jnp
import numpy as np
from jax.experimental import pallas as pl
from jax.experimental.pallas import tpu as pltpu


# --------------------------------------------------------------------------
# Kernel
# --------------------------------------------------------------------------
def _decoder_kernel(*refs, tn, has_r, compute_dtype, cache_dtype):
    if has_r:
        (z_ref, lib_ref, w1_ref, b1_ref, g_ref, bt_ref, wh_ref, bh_ref,
         scale_ref, rate_ref, drop_ref, r_ref,
         px_s, m_s, l_s, inv_s, ratec_s, mj_s, e0_s) = refs
    else:
        (z_ref, lib_ref, w1_ref, b1_ref, g_ref, bt_ref, wh_ref, bh_ref,
         scale_ref, rate_ref, drop_ref,
         px_s, m_s, l_s, inv_s, ratec_s, mj_s, e0_s) = refs
        r_ref = None

    p = pl.program_id(0)   # 0: hidden+BN, packed head matmul, softmax stats
    j = pl.program_id(1)   # n_output (gene) tile index

    # ---- once, at the first grid step: hidden layer + BN + ReLU ------------
    @pl.when((p == 0) & (j == 0))
    def _init():
        zc = z_ref[...].astype(compute_dtype)
        h = jnp.dot(zc, w1_ref[...],
                    preferred_element_type=jnp.float32) + b1_ref[...]
        # BatchNorm1d (training mode): biased batch statistics, eps=1e-3,
        # folded into a single scale/shift FMA.
        mean = jnp.mean(h, axis=0, keepdims=True)
        var = jnp.mean(jnp.square(h - mean), axis=0, keepdims=True)
        bn_scale = g_ref[...] * jax.lax.rsqrt(var + 1e-3)
        bn_shift = bt_ref[...] - mean * bn_scale
        px_s[...] = jnp.maximum(h * bn_scale + bn_shift,
                                0.0).astype(compute_dtype)
        m_s[...] = jnp.full(m_s.shape, -jnp.inf, dtype=jnp.float32)
        l_s[...] = jnp.zeros(l_s.shape, dtype=jnp.float32)

    # ---- pass 0: one wide matmul over [scale | r | dropout] per tile -------
    @pl.when(p == 0)
    def _pass0():
        big = jnp.dot(px_s[...], wh_ref[0],
                      preferred_element_type=jnp.float32) + bh_ref[0]
        s = big[:, :tn]                                   # scale-head logits
        if has_r:
            r_ref[...] = big[:, tn:2 * tn].astype(r_ref.dtype)
            drop_ref[...] = big[:, 2 * tn:].astype(drop_ref.dtype)
        else:
            drop_ref[...] = big[:, tn:].astype(drop_ref.dtype)
        # Online softmax statistics + cache exp(s - m_j) for pass 1.
        m_new = jnp.maximum(m_s[...], jnp.max(s, axis=-1, keepdims=True))
        e0 = jnp.exp(s - m_new)
        e0_s[j] = e0.astype(cache_dtype)
        mj_s[j] = m_new
        l_s[...] = (l_s[...] * jnp.exp(m_s[...] - m_new)
                    + jnp.sum(e0, axis=-1, keepdims=True))
        m_s[...] = m_new

    # ---- start of pass 1: finalize softmax denominator + rate coefficient --
    @pl.when((p == 1) & (j == 0))
    def _finalize():
        inv = pl.reciprocal(l_s[...], approx=False)       # EUP, off the VALU
        inv_s[...] = inv
        ratec_s[...] = jnp.exp(jnp.minimum(lib_ref[...], 12.0)) * inv

    # ---- pass 1: rescale the cached exp(s - m_j) and store scale / rate ----
    @pl.when(p == 1)
    def _pass1():
        c = jnp.exp(mj_s[j] - m_s[...])                   # (B,1) tile correction
        e0 = e0_s[j].astype(jnp.float32)
        scale_ref[...] = (e0 * (c * inv_s[...])).astype(scale_ref.dtype)
        rate_ref[...] = (e0 * (c * ratec_s[...])).astype(rate_ref.dtype)


# --------------------------------------------------------------------------
# One-time prepack (weights never touched again per call)
# --------------------------------------------------------------------------
def _round_up(x, m):
    return (x + m - 1) // m * m


def _vmem_capacity_bytes():
    try:
        info = pltpu.get_tpu_info()
        cap = getattr(info, "vmem_capacity_bytes", None)
        if cap:
            return int(cap)
    except Exception:
        pass
    return 64 * 1024 * 1024            # conservative (v7x physical VMEM)


def _choose_tn(n_output, n_hidden, n_heads, n_outs, head_bytes,
               max_batch, vmem_bytes):
    """Largest lane-aligned n_output tile whose working set fits in VMEM."""
    full = _round_up(n_output, 128)
    budget = int(vmem_bytes * 0.6)
    cands = sorted({min(full, t)
                    for t in (full, 4096, 2048, 1024, 512, 256, 128)},
                   reverse=True)
    for tn in cands:
        nt = -(-n_output // tn)
        need = (2 * n_hidden * n_heads * tn * head_bytes   # packed W (x2 bufs)
                + 2 * n_outs * max_batch * tn * 4          # out blocks (x2 bufs)
                + max_batch * nt * tn * 4                  # exp(s - m_j) cache
                + max_batch * n_hidden * 4                 # hidden scratch
                + 2 * 1024 * 1024)                         # misc headroom
        if need <= budget:
            return tn
    return 128


def prepack_decoder_scvi(params, dispersion, *, tn=None,
                         head_dtype=jnp.bfloat16, max_batch=1024):
    """One-time weight padding / per-tile packing / casting.

    Head weights default to bf16 on every TPU generation (the kernel is
    weight-DMA bound at typical scVI batch sizes); biases stay f32 so the
    -1e30 softmax padding mask is exact.
    """
    f32 = jnp.float32
    n_input, n_hidden = params["w1"].shape
    n_output = params["ws"].shape[1]
    has_r = (dispersion == "gene-cell")
    n_heads = 3 if has_r else 2            # [scale | r | dropout] / [scale | dropout]
    n_outs = 3 + int(has_r)
    head_dtype = np.dtype(head_dtype)
    head_bytes = head_dtype.itemsize

    vmem_bytes = _vmem_capacity_bytes()
    if tn is None:
        tn = _choose_tn(n_output, n_hidden, n_heads, n_outs, head_bytes,
                        max_batch, vmem_bytes)
    tn = _round_up(min(tn, _round_up(n_output, 128)), 128)
    nt = -(-n_output // tn)
    n_pad = nt * tn
    k_pad = _round_up(n_input, 128)

    def pad_cols(a, value=0.0):
        return jnp.pad(a.astype(f32), ((0, 0), (0, n_pad - n_output)),
                       constant_values=value)

    heads_w = [pad_cols(params["ws"])]
    heads_b = [pad_cols(params["bs"], value=-1e30)]   # padded genes -> softmax 0
    if has_r:
        heads_w.append(pad_cols(params["wr"]))
        heads_b.append(pad_cols(params["br"]))
    heads_w.append(pad_cols(params["wd"]))
    heads_b.append(pad_cols(params["bd"]))

    def per_tile(w):                                   # (H, n_pad) -> (nt, H, tn)
        return w.reshape(n_hidden, nt, tn).transpose(1, 0, 2)

    wh = jnp.concatenate([per_tile(w) for w in heads_w], axis=2).astype(head_dtype)
    bh = jnp.concatenate([b.reshape(nt, 1, tn) for b in heads_b], axis=2)   # f32

    w1 = jnp.pad(params["w1"].astype(f32),
                 ((0, k_pad - n_input), (0, 0))).astype(head_dtype)

    return dict(
        w1=w1, b1=params["b1"].astype(f32),
        gamma=params["gamma"].astype(f32), beta=params["beta"].astype(f32),
        wh=wh, bh=bh,
        n_input=n_input, k_pad=k_pad, n_hidden=n_hidden, n_output=n_output,
        n_pad=n_pad, tn=tn, nt=nt, n_heads=n_heads, has_r=has_r,
        head_dtype=head_dtype,
        vmem_limit_bytes=min(int(vmem_bytes * 0.8), 100 * 1024 * 1024),
    )


# --------------------------------------------------------------------------
# Per-call wrapper
# --------------------------------------------------------------------------
def decoder_scvi_pallas(packed, z, library, *, out_dtype=jnp.float32,
                        cache_dtype=jnp.float32):
    """Pallas implementation of DecoderSCVI.forward (n_cat_list=None).

    `packed` comes from `prepack_decoder_scvi`.  out_dtype=bfloat16 halves the
    HBM writeback of the (B, n_output) outputs; cache_dtype=bfloat16 halves the
    in-VMEM softmax cache (useful on v7x's 64 MiB VMEM at large B*n_output).
    """
    f32 = jnp.float32
    B = z.shape[0]
    n_hidden, n_output = packed["n_hidden"], packed["n_output"]
    n_pad, tn, nt = packed["n_pad"], packed["tn"], packed["nt"]
    n_heads, has_r = packed["n_heads"], packed["has_r"]
    n_input, k_pad = packed["n_input"], packed["k_pad"]
    compute_dtype = packed["head_dtype"]
    cache_dtype = np.dtype(cache_dtype)

    # Only per-call input prep: pad z's contraction dim (O(B*128) bytes) and
    # reshape library; all weight work happened once in prepack.
    z_p = jnp.pad(z.astype(f32), ((0, 0), (0, k_pad - n_input)))
    lib = library.astype(f32).reshape(B, 1)

    def full_spec(arr):
        nd = arr.ndim
        return pl.BlockSpec(arr.shape, lambda p, j, _nd=nd: (0,) * _nd)

    # Packed head weights/biases are only needed in pass 0; during pass 1 their
    # block index is pinned to the last tile so they are never re-DMA'd.
    pinned_in = lambda p, j: (j * (1 - p) + (nt - 1) * p, 0, 0)
    in_specs = [
        # TODO(synk): grid-invariant inputs could use pipeline_mode=
        # pl.Buffered(1) to drop their second pipeline buffer (minor VMEM win).
        full_spec(z_p), full_spec(lib),
        full_spec(packed["w1"]), full_spec(packed["b1"]),
        full_spec(packed["gamma"]), full_spec(packed["beta"]),
        pl.BlockSpec((1, n_hidden, n_heads * tn), pinned_in),   # [ws|wr|wd] pack
        pl.BlockSpec((1, 1, n_heads * tn), pinned_in),          # [bs|br|bd] pack
    ]

    # scale/rate are written in pass 1 only (pinned to block 0 during pass 0);
    # r/dropout are written in pass 0 only (pinned to the last block in pass 1)
    # => every output block is written to HBM exactly once.
    spec_pass1 = pl.BlockSpec((B, tn), lambda p, j: (0, j * p))
    spec_pass0 = pl.BlockSpec((B, tn), lambda p, j: (0, j * (1 - p) + (nt - 1) * p))
    out_specs = [spec_pass1, spec_pass1, spec_pass0]
    out_shape = [jax.ShapeDtypeStruct((B, n_pad), out_dtype) for _ in range(3)]
    if has_r:
        out_specs.append(spec_pass0)
        out_shape.append(jax.ShapeDtypeStruct((B, n_pad), out_dtype))

    scratch = [
        pltpu.VMEM((B, n_hidden), compute_dtype),  # px, cast to head dtype once
        pltpu.VMEM((B, 1), f32),                   # running max
        pltpu.VMEM((B, 1), f32),                   # running sum of exp
        pltpu.VMEM((B, 1), f32),                   # 1 / sum
        pltpu.VMEM((B, 1), f32),                   # exp(clamp(lib,12)) / sum
        pltpu.VMEM((nt, B, 1), f32),               # per-tile max snapshot m_j
        pltpu.VMEM((nt, B, tn), cache_dtype),      # cached exp(s - m_j)
        # TODO(synk): for very large B*n_output, spill the exp cache to the
        # px_scale HBM output (input_output_aliases) and tile the batch with BN
        # stats computed in a pre-pass instead of holding (nt,B,tn) in VMEM.
    ]

    head_bytes = compute_dtype.itemsize
    out_bytes = np.dtype(out_dtype).itemsize
    n_outs = 3 + int(has_r)
    cost = pl.CostEstimate(
        flops=int(2 * B * k_pad * n_hidden + 2 * B * n_hidden * n_pad * n_heads),
        transcendentals=int(2 * B * n_pad + 2 * B + n_hidden),
        bytes_accessed=int(z_p.size * 4 + lib.size * 4
                           + packed["w1"].size * head_bytes
                           + packed["wh"].size * head_bytes
                           + packed["bh"].size * 4 + 3 * n_hidden * 4
                           + n_outs * B * n_pad * out_bytes),
    )

    kernel = functools.partial(_decoder_kernel, tn=tn, has_r=has_r,
                               compute_dtype=compute_dtype,
                               cache_dtype=cache_dtype)
    outs = pl.pallas_call(
        kernel,
        grid=(2, nt),
        in_specs=in_specs,
        out_specs=tuple(out_specs),
        out_shape=tuple(out_shape),
        scratch_shapes=scratch,
        cost_estimate=cost,
        compiler_params=pltpu.CompilerParams(
            # BatchNorm couples all rows and softmax couples all genes, so both
            # grid axes are sequential.  TODO(synk): on v7x, split the gene
            # axis across the two TensorCores with a CMEM exchange of (m, l).
            dimension_semantics=("arbitrary", "arbitrary"),
            vmem_limit_bytes=packed["vmem_limit_bytes"]),
    )(z_p, lib, packed["w1"], packed["b1"], packed["gamma"], packed["beta"],
      packed["wh"], packed["bh"])

    if has_r:
        px_scale, px_rate, px_dropout, px_r = outs
    else:
        px_scale, px_rate, px_dropout = outs
        px_r = None

    if n_pad != n_output:
        px_scale = px_scale[:, :n_output]
        px_rate = px_rate[:, :n_output]
        px_dropout = px_dropout[:, :n_output]
        if px_r is not None:
            px_r = px_r[:, :n_output]
    return px_scale, px_r, px_rate, px_dropout


# --------------------------------------------------------------------------
# Reference, param construction, checks
# --------------------------------------------------------------------------
def decoder_scvi_ref(dispersion, z, library, params):
    """Pure-JAX reference for correctness checking."""
    h = z @ params["w1"] + params["b1"]
    mean = jnp.mean(h, axis=0, keepdims=True)
    var = jnp.mean((h - mean) ** 2, axis=0, keepdims=True)
    hn = (h - mean) / jnp.sqrt(var + 1e-3) * params["gamma"] + params["beta"]
    px = jnp.maximum(hn, 0.0)
    logits = px @ params["ws"] + params["bs"]
    px_scale = jax.nn.softmax(logits, axis=-1)
    px_drop = px @ params["wd"] + params["bd"]
    px_rate = jnp.exp(jnp.minimum(library, 12.0)) * px_scale
    px_r = (px @ params["wr"] + params["br"]) if dispersion == "gene-cell" else None
    return px_scale, px_r, px_rate, px_drop


def make_params(key, n_input, n_hidden, n_output):
    ks = jax.random.split(key, 4)

    def linear(kw, fan_in, fan_out):
        bound = 1.0 / np.sqrt(fan_in)
        kw1, kw2 = jax.random.split(kw)
        w = jax.random.uniform(kw1, (fan_in, fan_out), jnp.float32, -bound, bound)
        b = jax.random.uniform(kw2, (1, fan_out), jnp.float32, -bound, bound)
        return w, b

    w1, b1 = linear(ks[0], n_input, n_hidden)
    ws, bs = linear(ks[1], n_hidden, n_output)
    wr, br = linear(ks[2], n_hidden, n_output)
    wd, bd = linear(ks[3], n_hidden, n_output)
    gamma = jnp.ones((1, n_hidden), jnp.float32)
    beta = jnp.zeros((1, n_hidden), jnp.float32)
    return dict(w1=w1, b1=b1, gamma=gamma, beta=beta,
                ws=ws, bs=bs, wr=wr, br=br, wd=wd, bd=bd)


def _check(got_tuple, want_tuple, rtol, atol):
    for got, want in zip(got_tuple, want_tuple):
        if want is None:
            assert got is None
            continue
        np.testing.assert_allclose(np.asarray(got, dtype=np.float32),
                                   np.asarray(want), rtol=rtol, atol=atol)


if __name__ == "__main__":
    B, n_input, n_hidden, n_output = 8, 32, 128, 300

    key = jax.random.PRNGKey(0)
    kz, kl, kp = jax.random.split(key, 3)
    z = jax.random.normal(kz, (B, n_input), jnp.float32)
    # library sizes around log-counts; some above the clamp threshold of 12
    library = jax.random.uniform(kl, (B, 1), jnp.float32, 5.0, 14.0)
    params = make_params(kp, n_input, n_hidden, n_output)

    ref = decoder_scvi_ref("gene-cell", z, library, params)

    # 1) f32 heads, tn=128 -> 3 gene tiles: exercises the two-pass cached
    #    softmax, the -1e30 padding mask (300 -> 384) and the packed 3-head
    #    matmul.  Strict tolerance proves the math.
    packed_f32 = prepack_decoder_scvi(params, "gene-cell", tn=128,
                                      head_dtype=jnp.float32)
    out = jax.block_until_ready(decoder_scvi_pallas(packed_f32, z, library))
    _check(out, ref, rtol=1e-4, atol=1e-4)

    # 2) default prepack: bf16 weights + VMEM-derived tile size (single tile).
    packed_bf16 = prepack_decoder_scvi(params, "gene-cell")
    out_bf = jax.block_until_ready(decoder_scvi_pallas(packed_bf16, z, library))
    _check(out_bf, ref, rtol=5e-2, atol=5e-2)

    # 3) dispersion != 'gene-cell': the r head is dropped from the packed
    #    weights entirely (no matmul, no HBM write).
    ref2 = decoder_scvi_ref("gene", z, library, params)
    packed_g = prepack_decoder_scvi(params, "gene", tn=128,
                                    head_dtype=jnp.float32)
    out2 = decoder_scvi_pallas(packed_g, z, library)
    jax.block_until_ready([o for o in out2 if o is not None])
    assert out2[1] is None
    _check(out2, ref2, rtol=1e-4, atol=1e-4)

    # 4) bf16 outputs + bf16 softmax cache (halved HBM writeback / VMEM cache).
    out3 = jax.block_until_ready(
        decoder_scvi_pallas(packed_f32, z, library,
                            out_dtype=jnp.bfloat16, cache_dtype=jnp.bfloat16))
    _check(out3, ref, rtol=5e-2, atol=5e-2)

    print("KERNEL_OK")
</pallas_src>

<mosaic_0001>
module attributes {stable_mosaic.version = 11 : i64} {
  func.func @_decoder_kernel(%arg0: i32, %arg1: i32, %arg2: memref<8x128xf32, #tpu.memory_space<vmem>>, %arg3: memref<8x1xf32, #tpu.memory_space<vmem>>, %arg4: memref<128x128xf32, #tpu.memory_space<vmem>>, %arg5: memref<1x128xf32, #tpu.memory_space<vmem>>, %arg6: memref<1x128xf32, #tpu.memory_space<vmem>>, %arg7: memref<1x128xf32, #tpu.memory_space<vmem>>, %arg8: memref<1x128x384xf32, #tpu.memory_space<vmem>>, %arg9: memref<1x1x384xf32, #tpu.memory_space<vmem>>, %arg10: memref<8x128xf32, #tpu.memory_space<vmem>>, %arg11: memref<8x128xf32, #tpu.memory_space<vmem>>, %arg12: memref<8x128xf32, #tpu.memory_space<vmem>>, %arg13: memref<8x128xf32, #tpu.memory_space<vmem>>, %arg14: memref<8x128xf32, #tpu.memory_space<vmem>>, %arg15: memref<8x1xf32, #tpu.memory_space<vmem>>, %arg16: memref<8x1xf32, #tpu.memory_space<vmem>>, %arg17: memref<8x1xf32, #tpu.memory_space<vmem>>, %arg18: memref<8x1xf32, #tpu.memory_space<vmem>>, %arg19: memref<3x8x1xf32, #tpu.memory_space<vmem>>, %arg20: memref<3x8x128xf32, #tpu.memory_space<vmem>>) attributes {dimension_semantics = [#tpu.dimension_semantics<arbitrary>, #tpu.dimension_semantics<arbitrary>], iteration_bounds = array<i64: 2, 3>, scalar_prefetch = 0 : i64, scratch_operands = 7 : i64, tpu.core_type = #tpu.core_type<tc>, window_params = [{pipeline_mode = #tpu.pipeline_mode<synchronous>, transform_indices = @transform_0, window_bounds = array<i64: 8, 128>}, {pipeline_mode = #tpu.pipeline_mode<synchronous>, transform_indices = @transform_1, window_bounds = array<i64: 8, 1>}, {pipeline_mode = #tpu.pipeline_mode<synchronous>, transform_indices = @transform_2, window_bounds = array<i64: 128, 128>}, {pipeline_mode = #tpu.pipeline_mode<synchronous>, transform_indices = @transform_3, window_bounds = array<i64: 1, 128>}, {pipeline_mode = #tpu.pipeline_mode<synchronous>, transform_indices = @transform_4, window_bounds = array<i64: 1, 128>}, {pipeline_mode = #tpu.pipeline_mode<synchronous>, transform_indices = @transform_5, window_bounds = array<i64: 1, 128>}, {transform_indices = @transform_6, window_bounds = array<i64: 1, 128, 384>}, {transform_indices = @transform_7, window_bounds = array<i64: 1, 1, 384>}, {transform_indices = @transform_8, window_bounds = array<i64: 8, 128>}, {transform_indices = @transform_9, window_bounds = array<i64: 8, 128>}, {transform_indices = @transform_10, window_bounds = array<i64: 8, 128>}, {transform_indices = @transform_11, window_bounds = array<i64: 8, 128>}]} {
    %c0_i32 = arith.constant 0 : i32
    %0 = arith.cmpi eq, %arg0, %c0_i32 : i32
    %c0_i32_0 = arith.constant 0 : i32
    %1 = arith.cmpi eq, %arg1, %c0_i32_0 : i32
    %2 = arith.andi %0, %1 : i1
    %3 = arith.extui %2 : i1 to i32
    %c0_i32_1 = arith.constant 0 : i32
    %4 = arith.cmpi ne, %3, %c0_i32_1 : i32
    scf.if %4 {
      %c0 = arith.constant 0 : index
      %c0_8 = arith.constant 0 : index
      %16 = vector.load %arg2[%c0, %c0_8] : memref<8x128xf32, #tpu.memory_space<vmem>>, vector<8x128xf32>
      %c0_9 = arith.constant 0 : index
      %c0_10 = arith.constant 0 : index
      %17 = vector.load %arg4[%c0_9, %c0_10] : memref<128x128xf32, #tpu.memory_space<vmem>>, vector<128x128xf32>
      %cst = arith.constant dense<0.000000e+00> : vector<8x128xf32>
      %18 = tpu.matmul %16, %17, %cst {dimension_numbers = #tpu.dot_dimension_numbers<[1], [0], [0], [1], [0, 0, 1, 1], [], []>} : vector<8x128xf32>, vector<128x128xf32>, vector<8x128xf32> -> vector<8x128xf32>
      %c0_11 = arith.constant 0 : index
      %c0_12 = arith.constant 0 : index
      %19 = vector.load %arg5[%c0_11, %c0_12] : memref<1x128xf32, #tpu.memory_space<vmem>>, vector<1x128xf32>
      %20 = vector.broadcast %19 : vector<1x128xf32> to vector<8x128xf32>
      %21 = arith.addf %18, %20 : vector<8x128xf32>
      %cst_13 = arith.constant dense<0.000000e+00> : vector<128xf32>
      %22 = vector.multi_reduction <add>, %21, %cst_13 [0] : vector<8x128xf32> to vector<128xf32>
      %23 = vector.shape_cast %22 : vector<128xf32> to vector<1x128xf32>
      %cst_14 = arith.constant 8.000000e+00 : f32
      %24 = vector.broadcast %cst_14 : f32 to vector<1x128xf32>
      %25 = arith.divf %23, %24 : vector<1x128xf32>
      %26 = vector.broadcast %25 : vector<1x128xf32> to vector<8x128xf32>
      %27 = arith.subf %21, %26 : vector<8x128xf32>
      %28 = arith.mulf %27, %27 : vector<8x128xf32>
      %cst_15 = arith.constant dense<0.000000e+00> : vector<128xf32>
      %29 = vector.multi_reduction <add>, %28, %cst_15 [0] : vector<8x128xf32> to vector<128xf32>
      %30 = vector.shape_cast %29 : vector<128xf32> to vector<1x128xf32>
      %cst_16 = arith.constant 8.000000e+00 : f32
      %31 = vector.broadcast %cst_16 : f32 to vector<1x128xf32>
      %32 = arith.divf %30, %31 : vector<1x128xf32>
      %c0_17 = arith.constant 0 : index
      %c0_18 = arith.constant 0 : index
      %33 = vector.load %arg6[%c0_17, %c0_18] : memref<1x128xf32, #tpu.memory_space<vmem>>, vector<1x128xf32>
      %cst_19 = arith.constant 1.000000e-03 : f32
      %34 = vector.broadcast %cst_19 : f32 to vector<1x128xf32>
      %35 = arith.addf %32, %34 : vector<1x128xf32>
      %36 = math.rsqrt %35 : vector<1x128xf32>
      %37 = arith.mulf %33, %36 : vector<1x128xf32>
      %c0_20 = arith.constant 0 : index
      %c0_21 = arith.constant 0 : index
      %38 = vector.load %arg7[%c0_20, %c0_21] : memref<1x128xf32, #tpu.memory_space<vmem>>, vector<1x128xf32>
      %39 = arith.mulf %25, %37 : vector<1x128xf32>
      %40 = arith.subf %38, %39 : vector<1x128xf32>
      %41 = vector.broadcast %37 : vector<1x128xf32> to vector<8x128xf32>
      %42 = arith.mulf %21, %41 : vector<8x128xf32>
      %43 = vector.broadcast %40 : vector<1x128xf32> to vector<8x128xf32>
      %44 = arith.addf %42, %43 : vector<8x128xf32>
      %cst_22 = arith.constant 0.000000e+00 : f32
      %45 = vector.broadcast %cst_22 : f32 to vector<8x128xf32>
      %46 = arith.maximumf %44, %45 : vector<8x128xf32>
      %c0_23 = arith.constant 0 : index
      %c0_24 = arith.constant 0 : index
      %47 = vector.load %arg14[%c0_23, %c0_24] : memref<8x128xf32, #tpu.memory_space<vmem>>, vector<8x128xf32>
      tpu.vector_store %arg14[%c0_23, %c0_24], %46 {strides = array<i32>} : memref<8x128xf32, #tpu.memory_space<vmem>>, vector<8x128xf32>,
      %cst_25 = arith.constant 0xFF800000 : f32
      %48 = vector.broadcast %cst_25 : f32 to vector<8x1xf32>
      %c0_26 = arith.constant 0 : index
      %c0_27 = arith.constant 0 : index
      %49 = vector.load %arg15[%c0_26, %c0_27] : memref<8x1xf32, #tpu.memory_space<vmem>>, vector<8x1xf32>
      tpu.vector_store %arg15[%c0_26, %c0_27], %48 {strides = array<i32>} : memref<8x1xf32, #tpu.memory_space<vmem>>, vector<8x1xf32>,
      %cst_28 = arith.constant 0.000000e+00 : f32
      %50 = vector.broadcast %cst_28 : f32 to vector<8x1xf32>
      %c0_29 = arith.constant 0 : index
      %c0_30 = arith.constant 0 : index
      %51 = vector.load %arg16[%c0_29, %c0_30] : memref<8x1xf32, #tpu.memory_space<vmem>>, vector<8x1xf32>
      tpu.vector_store %arg16[%c0_29, %c0_30], %50 {strides = array<i32>} : memref<8x1xf32, #tpu.memory_space<vmem>>, vector<8x1xf32>,
    } else {
    }
    %c0_i32_2 = arith.constant 0 : i32
    %5 = arith.cmpi eq, %arg0, %c0_i32_2 : i32
    %6 = arith.extui %5 : i1 to i32
    %c0_i32_3 = arith.constant 0 : i32
    %7 = arith.cmpi ne, %6, %c0_i32_3 : i32
    scf.if %7 {
      %c0 = arith.constant 0 : index
      %c0_8 = arith.constant 0 : index
      %16 = vector.load %arg14[%c0, %c0_8] : memref<8x128xf32, #tpu.memory_space<vmem>>, vector<8x128xf32>
      %c0_9 = arith.constant 0 : index
      %c0_10 = arith.constant 0 : index
      %c0_11 = arith.constant 0 : index
      %17 = vector.load %arg8[%c0_9, %c0_10, %c0_11] : memref<1x128x384xf32, #tpu.memory_space<vmem>>, vector<1x128x384xf32>
      %18 = vector.shape_cast %17 : vector<1x128x384xf32> to vector<128x384xf32>
      %cst = arith.constant dense<0.000000e+00> : vector<8x384xf32>
      %19 = tpu.matmul %16, %18, %cst {dimension_numbers = #tpu.dot_dimension_numbers<[1], [0], [0], [1], [0, 0, 1, 1], [], []>} : vector<8x128xf32>, vector<128x384xf32>, vector<8x384xf32> -> vector<8x384xf32>
      %c0_12 = arith.constant 0 : index
      %c0_13 = arith.constant 0 : index
      %c0_14 = arith.constant 0 : index
      %20 = vector.load %arg9[%c0_12, %c0_13, %c0_14] : memref<1x1x384xf32, #tpu.memory_space<vmem>>, vector<1x1x384xf32>
      %21 = vector.shape_cast %20 : vector<1x1x384xf32> to vector<1x384xf32>
      %22 = vector.broadcast %21 : vector<1x384xf32> to vector<8x384xf32>
      %23 = arith.addf %19, %22 : vector<8x384xf32>
      %24 = vector.extract_strided_slice %23 {offsets = [0, 0], sizes = [8, 128], strides = [1, 1]} : vector<8x384xf32> to vector<8x128xf32>
      %25 = vector.extract_strided_slice %23 {offsets = [0, 128], sizes = [8, 128], strides = [1, 1]} : vector<8x384xf32> to vector<8x128xf32>
      %c0_15 = arith.constant 0 : index
      %c0_16 = arith.constant 0 : index
      %26 = vector.load %arg13[%c0_15, %c0_16] : memref<8x128xf32, #tpu.memory_space<vmem>>, vector<8x128xf32>
      tpu.vector_store %arg13[%c0_15, %c0_16], %25 {strides = array<i32>} : memref<8x128xf32, #tpu.memory_space<vmem>>, vector<8x128xf32>,
      %27 = vector.extract_strided_slice %23 {offsets = [0, 256], sizes = [8, 128], strides = [1, 1]} : vector<8x384xf32> to vector<8x128xf32>
      %c0_17 = arith.constant 0 : index
      %c0_18 = arith.constant 0 : index
      %28 = vector.load %arg12[%c0_17, %c0_18] : memref<8x128xf32, #tpu.memory_space<vmem>>, vector<8x128xf32>
      tpu.vector_store %arg12[%c0_17, %c0_18], %27 {strides = array<i32>} : memref<8x128xf32, #tpu.memory_space<vmem>>, vector<8x128xf32>,
      %c0_19 = arith.constant 0 : index
      %c0_20 = arith.constant 0 : index
      %29 = vector.load %arg15[%c0_19, %c0_20] : memref<8x1xf32, #tpu.memory_space<vmem>>, vector<8x1xf32>
      %cst_21 = arith.constant dense<0xFF800000> : vector<8xf32>
      %30 = vector.multi_reduction <maximumf>, %24, %cst_21 [1] : vector<8x128xf32> to vector<8xf32>
      %31 = vector.shape_cast %30 : vector<8xf32> to vector<8x1xf32>
      %32 = arith.maximumf %29, %31 : vector<8x1xf32>
      %33 = vector.broadcast %32 : vector<8x1xf32> to vector<8x128xf32>
      %34 = arith.subf %24, %33 : vector<8x128xf32>
      %35 = math.exp %34 : vector<8x128xf32>
      %36 = arith.index_cast %arg1 : i32 to index
      %c0_22 = arith.constant 0 : index
      %c0_23 = arith.constant 0 : index
      %37 = vector.load %arg20[%36, %c0_22, %c0_23] : memref<3x8x128xf32, #tpu.memory_space<vmem>>, vector<1x8x128xf32>
      %38 = vector.shape_cast %37 : vector<1x8x128xf32> to vector<8x128xf32>
      %39 = vector.shape_cast %35 : vector<8x128xf32> to vector<1x8x128xf32>
      tpu.vector_store %arg20[%36, %c0_22, %c0_23], %39 {strides = array<i32>} : memref<3x8x128xf32, #tpu.memory_space<vmem>>, vector<1x8x128xf32>,
      %40 = arith.index_cast %arg1 : i32 to index
      %c0_24 = arith.constant 0 : index
      %c0_25 = arith.constant 0 : index
      %41 = vector.load %arg19[%40, %c0_24, %c0_25] : memref<3x8x1xf32, #tpu.memory_space<vmem>>, vector<1x8x1xf32>
      %42 = vector.shape_cast %41 : vector<1x8x1xf32> to vector<8x1xf32>
      %43 = vector.shape_cast %32 : vector<8x1xf32> to vector<1x8x1xf32>
      tpu.vector_store %arg19[%40, %c0_24, %c0_25], %43 {strides = array<i32>} : memref<3x8x1xf32, #tpu.memory_space<vmem>>, vector<1x8x1xf32>,
      %c0_26 = arith.constant 0 : index
      %c0_27 = arith.constant 0 : index
      %44 = vector.load %arg16[%c0_26, %c0_27] : memref<8x1xf32, #tpu.memory_space<vmem>>, vector<8x1xf32>
      %c0_28 = arith.constant 0 : index
      %c0_29 = arith.constant 0 : index
      %45 = vector.load %arg15[%c0_28, %c0_29] : memref<8x1xf32, #tpu.memory_space<vmem>>, vector<8x1xf32>
      %46 = arith.subf %45, %32 : vector<8x1xf32>
      %47 = math.exp %46 : vector<8x1xf32>
      %48 = arith.mulf %44, %47 : vector<8x1xf32>
      %cst_30 = arith.constant dense<0.000000e+00> : vector<8xf32>
      %49 = vector.multi_reduction <add>, %35, %cst_30 [1] : vector<8x128xf32> to vector<8xf32>
      %50 = vector.shape_cast %49 : vector<8xf32> to vector<8x1xf32>
      %51 = arith.addf %48, %50 : vector<8x1xf32>
      %c0_31 = arith.constant 0 : index
      %c0_32 = arith.constant 0 : index
      %52 = vector.load %arg16[%c0_31, %c0_32] : memref<8x1xf32, #tpu.memory_space<vmem>>, vector<8x1xf32>
      tpu.vector_store %arg16[%c0_31, %c0_32], %51 {strides = array<i32>} : memref<8x1xf32, #tpu.memory_space<vmem>>, vector<8x1xf32>,
      %c0_33 = arith.constant 0 : index
      %c0_34 = arith.constant 0 : index
      %53 = vector.load %arg15[%c0_33, %c0_34] : memref<8x1xf32, #tpu.memory_space<vmem>>, vector<8x1xf32>
      tpu.vector_store %arg15[%c0_33, %c0_34], %32 {strides = array<i32>} : memref<8x1xf32, #tpu.memory_space<vmem>>, vector<8x1xf32>,
    } else {
    }
    %c1_i32 = arith.constant 1 : i32
    %8 = arith.cmpi eq, %arg0, %c1_i32 : i32
    %c0_i32_4 = arith.constant 0 : i32
    %9 = arith.cmpi eq, %arg1, %c0_i32_4 : i32
    %10 = arith.andi %8, %9 : i1
    %11 = arith.extui %10 : i1 to i32
    %c0_i32_5 = arith.constant 0 : i32
    %12 = arith.cmpi ne, %11, %c0_i32_5 : i32
    scf.if %12 {
      %c0 = arith.constant 0 : index
      %c0_8 = arith.constant 0 : index
      %16 = vector.load %arg16[%c0, %c0_8] : memref<8x1xf32, #tpu.memory_space<vmem>>, vector<8x1xf32>
      %17 = tpu.reciprocal %16 : vector<8x1xf32> -> vector<8x1xf32>
      %c0_9 = arith.constant 0 : index
      %c0_10 = arith.constant 0 : index
      %18 = vector.load %arg17[%c0_9, %c0_10] : memref<8x1xf32, #tpu.memory_space<vmem>>, vector<8x1xf32>
      tpu.vector_store %arg17[%c0_9, %c0_10], %17 {strides = array<i32>} : memref<8x1xf32, #tpu.memory_space<vmem>>, vector<8x1xf32>,
      %c0_11 = arith.constant 0 : index
      %c0_12 = arith.constant 0 : index
      %19 = vector.load %arg3[%c0_11, %c0_12] : memref<8x1xf32, #tpu.memory_space<vmem>>, vector<8x1xf32>
      %cst = arith.constant 1.200000e+01 : f32
      %20 = vector.broadcast %cst : f32 to vector<8x1xf32>
      %21 = arith.minimumf %19, %20 : vector<8x1xf32>
      %22 = math.exp %21 : vector<8x1xf32>
      %23 = arith.mulf %22, %17 : vector<8x1xf32>
      %c0_13 = arith.constant 0 : index
      %c0_14 = arith.constant 0 : index
      %24 = vector.load %arg18[%c0_13, %c0_14] : memref<8x1xf32, #tpu.memory_space<vmem>>, vector<8x1xf32>
      tpu.vector_store %arg18[%c0_13, %c0_14], %23 {strides = array<i32>} : memref<8x1xf32, #tpu.memory_space<vmem>>, vector<8x1xf32>,
    } else {
    }
    %c1_i32_6 = arith.constant 1 : i32
    %13 = arith.cmpi eq, %arg0, %c1_i32_6 : i32
    %14 = arith.extui %13 : i1 to i32
    %c0_i32_7 = arith.constant 0 : i32
    %15 = arith.cmpi ne, %14, %c0_i32_7 : i32
    scf.if %15 {
      %16 = arith.index_cast %arg1 : i32 to index
      %c0 = arith.constant 0 : index
      %c0_8 = arith.constant 0 : index
      %17 = vector.load %arg19[%16, %c0, %c0_8] : memref<3x8x1xf32, #tpu.memory_space<vmem>>, vector<1x8x1xf32>
      %18 = vector.shape_cast %17 : vector<1x8x1xf32> to vector<8x1xf32>
      %c0_9 = arith.constant 0 : index
      %c0_10 = arith.constant 0 : index
      %19 = vector.load %arg15[%c0_9, %c0_10] : memref<8x1xf32, #tpu.memory_space<vmem>>, vector<8x1xf32>
      %20 = arith.subf %18, %19 : vector<8x1xf32>
      %21 = math.exp %20 : vector<8x1xf32>
      %22 = arith.index_cast %arg1 : i32 to index
      %c0_11 = arith.constant 0 : index
      %c0_12 = arith.constant 0 : index
      %23 = vector.load %arg20[%22, %c0_11, %c0_12] : memref<3x8x128xf32, #tpu.memory_space<vmem>>, vector<1x8x128xf32>
      %24 = vector.shape_cast %23 : vector<1x8x128xf32> to vector<8x128xf32>
      %c0_13 = arith.constant 0 : index
      %c0_14 = arith.constant 0 : index
      %25 = vector.load %arg17[%c0_13, %c0_14] : memref<8x1xf32, #tpu.memory_space<vmem>>, vector<8x1xf32>
      %26 = arith.mulf %21, %25 : vector<8x1xf32>
      %27 = vector.broadcast %26 : vector<8x1xf32> to vector<8x128xf32>
      %28 = arith.mulf %24, %27 : vector<8x128xf32>
      %c0_15 = arith.constant 0 : index
      %c0_16 = arith.constant 0 : index
      %29 = vector.load %arg10[%c0_15, %c0_16] : memref<8x128xf32, #tpu.memory_space<vmem>>, vector<8x128xf32>
      tpu.vector_store %arg10[%c0_15, %c0_16], %28 {strides = array<i32>} : memref<8x128xf32, #tpu.memory_space<vmem>>, vector<8x128xf32>,
      %c0_17 = arith.constant 0 : index
      %c0_18 = arith.constant 0 : index
      %30 = vector.load %arg18[%c0_17, %c0_18] : memref<8x1xf32, #tpu.memory_space<vmem>>, vector<8x1xf32>
      %31 = arith.mulf %21, %30 : vector<8x1xf32>
      %32 = vector.broadcast %31 : vector<8x1xf32> to vector<8x128xf32>
      %33 = arith.mulf %24, %32 : vector<8x128xf32>
      %c0_19 = arith.constant 0 : index
      %c0_20 = arith.constant 0 : index
      %34 = vector.load %arg11[%c0_19, %c0_20] : memref<8x128xf32, #tpu.memory_space<vmem>>, vector<8x128xf32>
      tpu.vector_store %arg11[%c0_19, %c0_20], %33 {strides = array<i32>} : memref<8x128xf32, #tpu.memory_space<vmem>>, vector<8x128xf32>,
    } else {
    }
    return
  }
  func.func @transform_0(%arg0: i32, %arg1: i32) -> (i32, i32) {
    %c0_i32 = arith.constant 0 : i32
    %c0_i32_0 = arith.constant 0 : i32
    %c0_i32_1 = arith.constant 0 : i32
    return %c0_i32, %c0_i32_0 : i32, i32
  }
  func.func @transform_1(%arg0: i32, %arg1: i32) -> (i32, i32) {
    %c0_i32 = arith.constant 0 : i32
    %c0_i32_0 = arith.constant 0 : i32
    %c0_i32_1 = arith.constant 0 : i32
    return %c0_i32, %c0_i32_0 : i32, i32
  }
  func.func @transform_2(%arg0: i32, %arg1: i32) -> (i32, i32) {
    %c0_i32 = arith.constant 0 : i32
    %c0_i32_0 = arith.constant 0 : i32
    %c0_i32_1 = arith.constant 0 : i32
    return %c0_i32, %c0_i32_0 : i32, i32
  }
  func.func @transform_3(%arg0: i32, %arg1: i32) -> (i32, i32) {
    %c0_i32 = arith.constant 0 : i32
    %c0_i32_0 = arith.constant 0 : i32
    %c0_i32_1 = arith.constant 0 : i32
    return %c0_i32, %c0_i32_0 : i32, i32
  }
  func.func @transform_4(%arg0: i32, %arg1: i32) -> (i32, i32) {
    %c0_i32 = arith.constant 0 : i32
    %c0_i32_0 = arith.constant 0 : i32
    %c0_i32_1 = arith.constant 0 : i32
    return %c0_i32, %c0_i32_0 : i32, i32
  }
  func.func @transform_5(%arg0: i32, %arg1: i32) -> (i32, i32) {
    %c0_i32 = arith.constant 0 : i32
    %c0_i32_0 = arith.constant 0 : i32
    %c0_i32_1 = arith.constant 0 : i32
    return %c0_i32, %c0_i32_0 : i32, i32
  }
  func.func @transform_6(%arg0: i32, %arg1: i32) -> (i32, i32, i32) {
    %c1_i32 = arith.constant 1 : i32
    %0 = arith.subi %c1_i32, %arg0 : i32
    %1 = arith.muli %arg1, %0 : i32
    %c2_i32 = arith.constant 2 : i32
    %2 = arith.muli %c2_i32, %arg0 : i32
    %3 = arith.addi %1, %2 : i32
    %c0_i32 = arith.constant 0 : i32
    %c0_i32_0 = arith.constant 0 : i32
    %c0_i32_1 = arith.constant 0 : i32
    return %3, %c0_i32, %c0_i32_0 : i32, i32, i32
  }
  func.func @transform_7(%arg0: i32, %arg1: i32) -> (i32, i32, i32) {
    %c1_i32 = arith.constant 1 : i32
    %0 = arith.subi %c1_i32, %arg0 : i32
    %1 = arith.muli %arg1, %0 : i32
    %c2_i32 = arith.constant 2 : i32
    %2 = arith.muli %c2_i32, %arg0 : i32
    %3 = arith.addi %1, %2 : i32
    %c0_i32 = arith.constant 0 : i32
    %c0_i32_0 = arith.constant 0 : i32
    %c0_i32_1 = arith.constant 0 : i32
    return %3, %c0_i32, %c0_i32_0 : i32, i32, i32
  }
  func.func @transform_8(%arg0: i32, %arg1: i32) -> (i32, i32) {
    %0 = arith.muli %arg1, %arg0 : i32
    %c0_i32 = arith.constant 0 : i32
    %c0_i32_0 = arith.constant 0 : i32
    return %c0_i32, %0 : i32, i32
  }
  func.func @transform_9(%arg0: i32, %arg1: i32) -> (i32, i32) {
    %0 = arith.muli %arg1, %arg0 : i32
    %c0_i32 = arith.constant 0 : i32
    %c0_i32_0 = arith.constant 0 : i32
    return %c0_i32, %0 : i32, i32
  }
  func.func @transform_10(%arg0: i32, %arg1: i32) -> (i32, i32) {
    %c1_i32 = arith.constant 1 : i32
    %0 = arith.subi %c1_i32, %arg0 : i32
    %1 = arith.muli %arg1, %0 : i32
    %c2_i32 = arith.constant 2 : i32
    %2 = arith.muli %c2_i32, %arg0 : i32
    %3 = arith.addi %1, %2 : i32
    %c0_i32 = arith.constant 0 : i32
    %c0_i32_0 = arith.constant 0 : i32
    return %c0_i32, %3 : i32, i32
  }
  func.func @transform_11(%arg0: i32, %arg1: i32) -> (i32, i32) {
    %c1_i32 = arith.constant 1 : i32
    %0 = arith.subi %c1_i32, %arg0 : i32
    %1 = arith.muli %arg1, %0 : i32
    %c2_i32 = arith.constant 2 : i32
    %2 = arith.muli %c2_i32, %arg0 : i32
    %3 = arith.addi %1, %2 : i32
    %c0_i32 = arith.constant 0 : i32
    %c0_i32_0 = arith.constant 0 : i32
    return %c0_i32, %3 : i32, i32
  }
}

</mosaic_0001>

<llo_original>
// kernel: tpu_custom_call.1
$region0: #{tpu_custom_call.1}
  #allocation0 [shape = 'u32[]', space=smem, size = 0x4, offset = 0x4, fixed_abs, tag = 'smem constant byte address 0x4 - core index']
  #allocation1 [shape = 'u32[72,128]{1,0:T(1,128)}', space=vmem, size = 0x9000, scoped, tag = 'internal scratch']
  #allocation2 [shape = 'f32[8,128]{1,0:T(8,128)}', space=vmem, size = 0x1000, scoped, tag = 'scratch operand']
  #allocation3 [shape = 'f32[8,1]{1,0:T(8,128)}', space=vmem, size = 0x1000, scoped, tag = 'scratch operand']
  #allocation4 [shape = 'f32[8,1]{1,0:T(8,128)}', space=vmem, size = 0x1000, scoped, tag = 'scratch operand']
  #allocation5 [shape = 'f32[8,1]{1,0:T(8,128)}', space=vmem, size = 0x1000, scoped, tag = 'scratch operand']
  #allocation6 [shape = 'f32[8,1]{1,0:T(8,128)}', space=vmem, size = 0x1000, scoped, tag = 'scratch operand']
  #allocation7 [shape = 'f32[3,8,1]{2,1,0:T(8,128)}', space=vmem, size = 0x3000, scoped, tag = 'scratch operand']
  #allocation8 [shape = 'f32[3,8,128]{2,1,0:T(8,128)}', space=vmem, size = 0x3000, scoped, tag = 'scratch operand']
  %s0 = inlined_call_operand.hbm [shape: f32[8,128], index: 0, kind: input, shape index: {}]
  %s1 = inlined_call_operand.vmem [shape: f32[8,1], index: 1, kind: input, shape index: {}]
  %s2 = inlined_call_operand.hbm [shape: f32[128,128], index: 2, kind: input, shape index: {}]
  %s3 = inlined_call_operand.vmem [shape: f32[1,128], index: 3, kind: input, shape index: {}]
  %s4 = inlined_call_operand.vmem [shape: f32[1,128], index: 4, kind: input, shape index: {}]
  %s5 = inlined_call_operand.vmem [shape: f32[1,128], index: 5, kind: input, shape index: {}]
  %s6 = inlined_call_operand.hbm [shape: f32[3,128,384], index: 6, kind: input, shape index: {}]
  %s7 = inlined_call_operand.vmem [shape: f32[3,1,384], index: 7, kind: input, shape index: {}]
  %s8 = inlined_call_operand.hbm [shape: f32[8,384], index: 8, kind: output, shape index: {0}]
  %s9 = inlined_call_operand.hbm [shape: f32[8,384], index: 9, kind: output, shape index: {1}]
  %s10 = inlined_call_operand.hbm [shape: f32[8,384], index: 10, kind: output, shape index: {2}]
  %s11 = inlined_call_operand.hbm [shape: f32[8,384], index: 11, kind: output, shape index: {3}]
  %12 = xla_tuple %s8, %s9, %s10, %s11
  %s13 = sld [smem:[#allocation0]]
  $region117: #{tpu_custom_call.1} parent=0
    _
  %s15 = ssub.s32 1, %s13
  %s16 = scalar_select 0, %s15, %s13
  $region1: #{tpu_custom_call.1} parent=0
    #allocation9 [shape = 'u8[4096]{0}', space=vmem, size = 0x1000, scoped, tag = 'input window, operand 0, single buffered']
    #allocation10 [shape = 's32[2]{0}', space=sflag, size = 0x8, scoped, tag = 'scoped memory for tpu_custom_call.1']
    #allocation11 [shape = 's32[2]{0}', space=sflag, size = 0x8, scoped, tag = 'scoped memory for tpu_custom_call.1']
    #allocation12 [shape = 'u8[65536]{0}', space=vmem, size = 0x10000, scoped, tag = 'input window, operand 2, single buffered']
    #allocation13 [shape = 's32[1]{0}', space=sflag, size = 0x4, scoped, tag = 'scoped memory for tpu_custom_call.1']
    #allocation14 [shape = 'u8[393216]{0}', space=vmem, size = 0x60000, scoped, tag = 'input window, operand 6']
    #allocation15 [shape = 'u8[8192]{0}', space=vmem, size = 0x2000, scoped, tag = 'output window, operand 0']
    #allocation16 [shape = 'u8[8192]{0}', space=vmem, size = 0x2000, scoped, tag = 'output window, operand 1']
    #allocation17 [shape = 's32[2]{0}', space=sflag, size = 0x8, scoped, tag = 'scoped memory for tpu_custom_call.1']
    #allocation18 [shape = 'u8[8192]{0}', space=vmem, size = 0x2000, scoped, tag = 'output window, operand 2']
    #allocation19 [shape = 'u8[8192]{0}', space=vmem, size = 0x2000, scoped, tag = 'output window, operand 3']
    #allocation20 [shape = 's32[2]{0}', space=sflag, size = 0x8, scoped, tag = 'scoped memory for tpu_custom_call.1']
    %17 = vsyncpa [#allocation10], 0
    %18 = vsyncpa [#allocation13], 0
    %19 = vsyncpa [#allocation11], 0
    %s20 = scalar_lea.sflag [#allocation11], 1
    %21 = vsyncpa %s20, 0
    %22 = vsyncpa [#allocation17], 0
    %s23 = scalar_lea.sflag [#allocation17], 1
    %24 = vsyncpa %s23, 0
    %25 = vsyncpa [#allocation20], 0
    %s26 = scalar_lea.sflag [#allocation20], 1
    %27 = vsyncpa %s26, 0
    loop: start=0, step=1, limit=8
    $region2: #{tpu_custom_call.1} parent=1 // loop_pre_header
      _
    $region3: #{tpu_custom_call.1} parent=1 // loop_header
      %s29 = sphi 0, %s33
      %p30 = scmp.ge.s32.totalorder %s29, 8
      %s36 = sphi 0, %s48
      %s37 = sphi 0, %s44
      %s38 = sphi 0, %s36
      %s39 = sphi 0, %s37
      %s40 = sphi 0, %s38
      %s41 = sphi 0, %s39
      %s49 = sphi 0, %s49
      %s51 = sphi 0, %s49
      %s52 = sphi 0, %s51
      %s66 = sphi 0, %s52
      %s70 = sphi 0, %s70
      %s72 = sphi 0, %s70
      %s73 = sphi 0, %s72
      %s87 = sphi 0, %s73
      %s91 = sphi 0, %s91
      %s93 = sphi 0, %s91
      %s94 = sphi 0, %s93
      %s108 = sphi 0, %s94
      %s112 = sphi 0, %s112
      %s114 = sphi 0, %s112
      %s115 = sphi 0, %s114
      %s129 = sphi 0, %s115
      %s133 = sphi 0, %s133
      %s135 = sphi 0, %s133
      %s136 = sphi 0, %s135
      %s150 = sphi 0, %s136
      %s154 = sphi 0, %s154
      %s156 = sphi 0, %s154
      %s157 = sphi 0, %s156
      %s171 = sphi 0, %s157
      %s185 = sphi 0, %s187
      %s188 = sphi 0, %s185
      %s189 = sphi 0, %s188
      %s205 = sphi 0, %s189
      %s219 = sphi 0, %s221
      %s222 = sphi 0, %s219
      %s223 = sphi 0, %s222
      %s239 = sphi 0, %s223
      %s247 = sphi 0, %s249
      %s250 = sphi 0, %s247
      %s251 = sphi 0, %s250
      %s267 = sphi 0, %s251
      %s275 = sphi 0, %s277
      %s278 = sphi 0, %s275
      %s279 = sphi 0, %s278
      %s295 = sphi 0, %s279
      %s309 = sphi 0, %s311
      %s312 = sphi 0, %s309
      %s313 = sphi 0, %s312
      %s329 = sphi 0, %s313
      %s343 = sphi 0, %s345
      %s346 = sphi 0, %s343
      %s347 = sphi 0, %s346
      %s363 = sphi 0, %s347
    $region4: #{tpu_custom_call.1} parent=1 // loop_header_branch
      %32 = sbr.rel (%p30) target = $region8
    $region5: #{tpu_custom_call.1} parent=1 // loop_body
      %s34 = ssub.s32 %s29, 1
      %s35 = ssub.s32 %s29, 2
      %s42 = sadd.s32 1, %s37
      %p43 = scmp.ge.s32.totalorder %s42, 3
      %s44 = scalar_select %p43, 0, %s42
      %s45 = sadd.s32 1, %s36
      %s46 = scalar_select %p43, %s45, %s36
      %p47 = scmp.ge.s32.totalorder %s46, 2
      %s48 = scalar_select %p47, 0, %s46
      %s50 = sadd.s32 %s49, 1
      %p53 = scmp.eq.s32.totalorder %s29, 5
      %p54 = scmp.ne.s32.totalorder %s49, %s51
      %p55 = scmp.eq.s32.totalorder %s29, 0
      %p56 = por %p54, %p55
      %p57 = scmp.ne.s32.totalorder %s49, %s51
      %p58 = scmp.eq.s32.totalorder %s34, 5
      %p59 = por %p57, %p58
      %p60 = scmp.ne.s32.totalorder %s51, %s52
      %p61 = scmp.eq.s32.totalorder %s34, 0
      %p62 = por %p60, %p61
      %p63 = scmp.ne.s32.totalorder %s51, %s52
      %p64 = scmp.eq.s32.totalorder %s35, 5
      %p65 = por %p63, %p64
      %p67 = scmp.ne.s32.totalorder %s52, %s66
      %p68 = scmp.eq.s32.totalorder %s35, 0
      %p69 = por %p67, %p68
      %s71 = sadd.s32 %s70, 1
      %p74 = scmp.eq.s32.totalorder %s29, 5
      %p75 = scmp.ne.s32.totalorder %s70, %s72
      %p76 = scmp.eq.s32.totalorder %s29, 0
      %p77 = por %p75, %p76
      %p78 = scmp.ne.s32.totalorder %s70, %s72
      %p79 = scmp.eq.s32.totalorder %s34, 5
      %p80 = por %p78, %p79
      %p81 = scmp.ne.s32.totalorder %s72, %s73
      %p82 = scmp.eq.s32.totalorder %s34, 0
      %p83 = por %p81, %p82
      %p84 = scmp.ne.s32.totalorder %s72, %s73
      %p85 = scmp.eq.s32.totalorder %s35, 5
      %p86 = por %p84, %p85
      %p88 = scmp.ne.s32.totalorder %s73, %s87
      %p89 = scmp.eq.s32.totalorder %s35, 0
      %p90 = por %p88, %p89
      %s92 = sadd.s32 %s91, 1
      %p95 = scmp.eq.s32.totalorder %s29, 5
      %p96 = scmp.ne.s32.totalorder %s91, %s93
      %p97 = scmp.eq.s32.totalorder %s29, 0
      %p98 = por %p96, %p97
      %p99 = scmp.ne.s32.totalorder %s91, %s93
      %p100 = scmp.eq.s32.totalorder %s34, 5
      %p101 = por %p99, %p100
      %p102 = scmp.ne.s32.totalorder %s93, %s94
      %p103 = scmp.eq.s32.totalorder %s34, 0
      %p104 = por %p102, %p103
      %p105 = scmp.ne.s32.totalorder %s93, %s94
      %p106 = scmp.eq.s32.totalorder %s35, 5
      %p107 = por %p105, %p106
      %p109 = scmp.ne.s32.totalorder %s94, %s108
      %p110 = scmp.eq.s32.totalorder %s35, 0
      %p111 = por %p109, %p110
      %s113 = sadd.s32 %s112, 1
      %p116 = scmp.eq.s32.totalorder %s29, 5
      %p117 = scmp.ne.s32.totalorder %s112, %s114
      %p118 = scmp.eq.s32.totalorder %s29, 0
      %p119 = por %p117, %p118
      %p120 = scmp.ne.s32.totalorder %s112, %s114
      %p121 = scmp.eq.s32.totalorder %s34, 5
      %p122 = por %p120, %p121
      %p123 = scmp.ne.s32.totalorder %s114, %s115
      %p124 = scmp.eq.s32.totalorder %s34, 0
      %p125 = por %p123, %p124
      %p126 = scmp.ne.s32.totalorder %s114, %s115
      %p127 = scmp.eq.s32.totalorder %s35, 5
      %p128 = por %p126, %p127
      %p130 = scmp.ne.s32.totalorder %s115, %s129
      %p131 = scmp.eq.s32.totalorder %s35, 0
      %p132 = por %p130, %p131
      %s134 = sadd.s32 %s133, 1
      %p137 = scmp.eq.s32.totalorder %s29, 5
      %p138 = scmp.ne.s32.totalorder %s133, %s135
      %p139 = scmp.eq.s32.totalorder %s29, 0
      %p140 = por %p138, %p139
      %p141 = scmp.ne.s32.totalorder %s133, %s135
      %p142 = scmp.eq.s32.totalorder %s34, 5
      %p143 = por %p141, %p142
      %p144 = scmp.ne.s32.totalorder %s135, %s136
      %p145 = scmp.eq.s32.totalorder %s34, 0
      %p146 = por %p144, %p145
      %p147 = scmp.ne.s32.totalorder %s135, %s136
      %p148 = scmp.eq.s32.totalorder %s35, 5
      %p149 = por %p147, %p148
      %p151 = scmp.ne.s32.totalorder %s136, %s150
      %p152 = scmp.eq.s32.totalorder %s35, 0
      %p153 = por %p151, %p152
      %s155 = sadd.s32 %s154, 1
      %p158 = scmp.eq.s32.totalorder %s29, 5
      %p159 = scmp.ne.s32.totalorder %s154, %s156
      %p160 = scmp.eq.s32.totalorder %s29, 0
      %p161 = por %p159, %p160
      %p162 = scmp.ne.s32.totalorder %s154, %s156
      %p163 = scmp.eq.s32.totalorder %s34, 5
      %p164 = por %p162, %p163
      %p165 = scmp.ne.s32.totalorder %s156, %s157
      %p166 = scmp.eq.s32.totalorder %s34, 0
      %p167 = por %p165, %p166
      %p168 = scmp.ne.s32.totalorder %s156, %s157
      %p169 = scmp.eq.s32.totalorder %s35, 5
      %p170 = por %p168, %p169
      %p172 = scmp.ne.s32.totalorder %s157, %s171
      %p173 = scmp.eq.s32.totalorder %s35, 0
      %p174 = por %p172, %p173
      %s175 = ssub.s32 1, %s36
      %s176 = smul.u32 %s37, %s175
      %s177 = smul.u32 %s36, 2
      %s178 = sadd.s32 %s176, %s177
      %s179 = ssub.s32 1, %s48
      %s180 = smul.u32 %s44, %s179
      %s181 = smul.u32 %s48, 2
      %s182 = sadd.s32 %s180, %s181
      %s183 = ssub.s32 %s178, %s182
      %p184 = scmp.eq.s32.totalorder %s183, 0
      %s186 = sadd.s32 %s185, 1
      %s187 = scalar_select %p184, %s185, %s186
      %p190 = pneg %p184
      %p191 = scmp.eq.s32.totalorder %s29, 5
      %p192 = por %p190, %p191
      %p193 = scmp.ne.s32.totalorder %s185, %s188
      %p194 = scmp.eq.s32.totalorder %s29, 0
      %p195 = por %p193, %p194
      %p196 = scmp.ne.s32.totalorder %s185, %s188
      %p197 = scmp.eq.s32.totalorder %s34, 5
      %p198 = por %p196, %p197
      %p199 = scmp.ne.s32.totalorder %s188, %s189
      %p200 = scmp.eq.s32.totalorder %s34, 0
      %p201 = por %p199, %p200
      %p202 = scmp.ne.s32.totalorder %s188, %s189
      %p203 = scmp.eq.s32.totalorder %s35, 5
      %p204 = por %p202, %p203
      %p206 = scmp.ne.s32.totalorder %s189, %s205
      %p207 = scmp.eq.s32.totalorder %s35, 0
      %p208 = por %p206, %p207
      %s209 = ssub.s32 1, %s36
      %s210 = smul.u32 %s37, %s209
      %s211 = smul.u32 %s36, 2
      %s212 = sadd.s32 %s210, %s211
      %s213 = ssub.s32 1, %s48
      %s214 = smul.u32 %s44, %s213
      %s215 = smul.u32 %s48, 2
      %s216 = sadd.s32 %s214, %s215
      %s217 = ssub.s32 %s212, %s216
      %p218 = scmp.eq.s32.totalorder %s217, 0
      %s220 = sadd.s32 %s219, 1
      %s221 = scalar_select %p218, %s219, %s220
      %p224 = pneg %p218
      %p225 = scmp.eq.s32.totalorder %s29, 5
      %p226 = por %p224, %p225
      %p227 = scmp.ne.s32.totalorder %s219, %s222
      %p228 = scmp.eq.s32.totalorder %s29, 0
      %p229 = por %p227, %p228
      %p230 = scmp.ne.s32.totalorder %s219, %s222
      %p231 = scmp.eq.s32.totalorder %s34, 5
      %p232 = por %p230, %p231
      %p233 = scmp.ne.s32.totalorder %s222, %s223
      %p234 = scmp.eq.s32.totalorder %s34, 0
      %p235 = por %p233, %p234
      %p236 = scmp.ne.s32.totalorder %s222, %s223
      %p237 = scmp.eq.s32.totalorder %s35, 5
      %p238 = por %p236, %p237
      %p240 = scmp.ne.s32.totalorder %s223, %s239
      %p241 = scmp.eq.s32.totalorder %s35, 0
      %p242 = por %p240, %p241
      %s243 = smul.u32 %s37, %s36
      %s244 = smul.u32 %s44, %s48
      %s245 = ssub.s32 %s243, %s244
      %p246 = scmp.eq.s32.totalorder %s245, 0
      %s248 = sadd.s32 %s247, 1
      %s249 = scalar_select %p246, %s247, %s248
      %p252 = pneg %p246
      %p253 = scmp.eq.s32.totalorder %s29, 5
      %p254 = por %p252, %p253
      %p255 = scmp.ne.s32.totalorder %s247, %s250
      %p256 = scmp.eq.s32.totalorder %s29, 0
      %p257 = por %p255, %p256
      %p258 = scmp.ne.s32.totalorder %s247, %s250
      %p259 = scmp.eq.s32.totalorder %s34, 5
      %p260 = por %p258, %p259
      %p261 = scmp.ne.s32.totalorder %s250, %s251
      %p262 = scmp.eq.s32.totalorder %s34, 0
      %p263 = por %p261, %p262
      %p264 = scmp.ne.s32.totalorder %s250, %s251
      %p265 = scmp.eq.s32.totalorder %s35, 5
      %p266 = por %p264, %p265
      %p268 = scmp.ne.s32.totalorder %s251, %s267
      %p269 = scmp.eq.s32.totalorder %s35, 0
      %p270 = por %p268, %p269
      %s271 = smul.u32 %s37, %s36
      %s272 = smul.u32 %s44, %s48
      %s273 = ssub.s32 %s271, %s272
      %p274 = scmp.eq.s32.totalorder %s273, 0
      %s276 = sadd.s32 %s275, 1
      %s277 = scalar_select %p274, %s275, %s276
      %p280 = pneg %p274
      %p281 = scmp.eq.s32.totalorder %s29, 5
      %p282 = por %p280, %p281
      %p283 = scmp.ne.s32.totalorder %s275, %s278
      %p284 = scmp.eq.s32.totalorder %s29, 0
      %p285 = por %p283, %p284
      %p286 = scmp.ne.s32.totalorder %s275, %s278
      %p287 = scmp.eq.s32.totalorder %s34, 5
      %p288 = por %p286, %p287
      %p289 = scmp.ne.s32.totalorder %s278, %s279
      %p290 = scmp.eq.s32.totalorder %s34, 0
      %p291 = por %p289, %p290
      %p292 = scmp.ne.s32.totalorder %s278, %s279
      %p293 = scmp.eq.s32.totalorder %s35, 5
      %p294 = por %p292, %p293
      %p296 = scmp.ne.s32.totalorder %s279, %s295
      %p297 = scmp.eq.s32.totalorder %s35, 0
      %p298 = por %p296, %p297
      %s299 = ssub.s32 1, %s36
      %s300 = smul.u32 %s37, %s299
      %s301 = smul.u32 %s36, 2
      %s302 = sadd.s32 %s300, %s301
      %s303 = ssub.s32 1, %s48
      %s304 = smul.u32 %s44, %s303
      %s305 = smul.u32 %s48, 2
      %s306 = sadd.s32 %s304, %s305
      %s307 = ssub.s32 %s302, %s306
      %p308 = scmp.eq.s32.totalorder %s307, 0
      %s310 = sadd.s32 %s309, 1
      %s311 = scalar_select %p308, %s309, %s310
      %p314 = pneg %p308
      %p315 = scmp.eq.s32.totalorder %s29, 5
      %p316 = por %p314, %p315
      %p317 = scmp.ne.s32.totalorder %s309, %s312
      %p318 = scmp.eq.s32.totalorder %s29, 0
      %p319 = por %p317, %p318
      %p320 = scmp.ne.s32.totalorder %s309, %s312
      %p321 = scmp.eq.s32.totalorder %s34, 5
      %p322 = por %p320, %p321
      %p323 = scmp.ne.s32.totalorder %s312, %s313
      %p324 = scmp.eq.s32.totalorder %s34, 0
      %p325 = por %p323, %p324
      %p326 = scmp.ne.s32.totalorder %s312, %s313
      %p327 = scmp.eq.s32.totalorder %s35, 5
      %p328 = por %p326, %p327
      %p330 = scmp.ne.s32.totalorder %s313, %s329
      %p331 = scmp.eq.s32.totalorder %s35, 0
      %p332 = por %p330, %p331
      %s333 = ssub.s32 1, %s36
      %s334 = smul.u32 %s37, %s333
      %s335 = smul.u32 %s36, 2
      %s336 = sadd.s32 %s334, %s335
      %s337 = ssub.s32 1, %s48
      %s338 = smul.u32 %s44, %s337
      %s339 = smul.u32 %s48, 2
      %s340 = sadd.s32 %s338, %s339
      %s341 = ssub.s32 %s336, %s340
      %p342 = scmp.eq.s32.totalorder %s341, 0
      %s344 = sadd.s32 %s343, 1
      %s345 = scalar_select %p342, %s343, %s344
      %p348 = pneg %p342
      %p349 = scmp.eq.s32.totalorder %s29, 5
      %p350 = por %p348, %p349
      %p351 = scmp.ne.s32.totalorder %s343, %s346
      %p352 = scmp.eq.s32.totalorder %s29, 0
      %p353 = por %p351, %p352
      %p354 = scmp.ne.s32.totalorder %s343, %s346
      %p355 = scmp.eq.s32.totalorder %s34, 5
      %p356 = por %p354, %p355
      %p357 = scmp.ne.s32.totalorder %s346, %s347
      %p358 = scmp.eq.s32.totalorder %s34, 0
      %p359 = por %p357, %p358
      %p360 = scmp.ne.s32.totalorder %s346, %s347
      %p361 = scmp.eq.s32.totalorder %s35, 5
      %p362 = por %p360, %p361
      %p364 = scmp.ne.s32.totalorder %s347, %s363
      %p365 = scmp.eq.s32.totalorder %s35, 0
      %p366 = por %p364, %p365
      %p367 = scmp.le.s32.totalorder 1, %s29
      %p368 = scmp.lt.s32.totalorder %s29, 7
      %p369 = pnand %p367, %p368
      %p370 = pneg %p369
      // Predicated region
      $region9: #{tpu_custom_call.1} parent=5 // pred_check
        _
      $region10: #{tpu_custom_call.1} parent=5 // pred_check_branch
        %372 = sbr.rel (%p369) target = $region12
      $region11: #{tpu_custom_call.1} parent=5 // pred_region
        %s373 = ssub.s32 %s29, 1
        // Predicated region
        $region13: #{tpu_custom_call.1} parent=11 // pred_check
          %p374 = pneg %p62
        $region14: #{tpu_custom_call.1} parent=11 // pred_check_branch
          %376 = sbr.rel (%p374) target = $region16
        $region15: #{tpu_custom_call.1} parent=11 // pred_region
          %378 = vsyncadd [#allocation10], 0
          %s380 = sshll.u32 %s0, 4
          %s381 = int_to_ptr.hbm [resolvable:$true] %s380
          %s382 = sshll.u32 [#allocation9], 4
          %s383 = int_to_ptr.vmem [resolvable:$true] %s382
          %385 = dma.hbm_to_vmem [thread:$0]  %s381, 128, %s383, [#allocation10]
        $region16: #{tpu_custom_call.1} parent=11 // pred_fallthru
          _
        // Predicated region
        $region17: #{tpu_custom_call.1} parent=11 // pred_check
          %p386 = pneg %p83
        $region18: #{tpu_custom_call.1} parent=11 // pred_check_branch
          %388 = sbr.rel (%p386) target = $region20
        $region19: #{tpu_custom_call.1} parent=11 // pred_region
          _
        $region20: #{tpu_custom_call.1} parent=11 // pred_fallthru
          _
        // Predicated region
        $region21: #{tpu_custom_call.1} parent=11 // pred_check
          %p389 = pneg %p104
        $region22: #{tpu_custom_call.1} parent=11 // pred_check_branch
          %391 = sbr.rel (%p389) target = $region24
        $region23: #{tpu_custom_call.1} parent=11 // pred_region
          %393 = vsyncadd [#allocation13], 0
          %s394 = sshll.u32 %s2, 4
          %s395 = int_to_ptr.hbm [resolvable:$true] %s394
          %s396 = sshll.u32 [#allocation12], 4
          %s397 = int_to_ptr.vmem [resolvable:$true] %s396
          %402 = dma.hbm_to_vmem [thread:$0]  %s395, 2048, %s397, [#allocation13], 128, 128, 8
        $region24: #{tpu_custom_call.1} parent=11 // pred_fallthru
          _
        // Predicated region
        $region25: #{tpu_custom_call.1} parent=11 // pred_check
          %p403 = pneg %p125
        $region26: #{tpu_custom_call.1} parent=11 // pred_check_branch
          %405 = sbr.rel (%p403) target = $region28
        $region27: #{tpu_custom_call.1} parent=11 // pred_region
          _
        $region28: #{tpu_custom_call.1} parent=11 // pred_fallthru
          _
        // Predicated region
        $region29: #{tpu_custom_call.1} parent=11 // pred_check
          %p406 = pneg %p146
        $region30: #{tpu_custom_call.1} parent=11 // pred_check_branch
          %408 = sbr.rel (%p406) target = $region32
        $region31: #{tpu_custom_call.1} parent=11 // pred_region
          _
        $region32: #{tpu_custom_call.1} parent=11 // pred_fallthru
          _
        // Predicated region
        $region33: #{tpu_custom_call.1} parent=11 // pred_check
          %p409 = pneg %p167
        $region34: #{tpu_custom_call.1} parent=11 // pred_check_branch
          %411 = sbr.rel (%p409) target = $region36
        $region35: #{tpu_custom_call.1} parent=11 // pred_region
          _
        $region36: #{tpu_custom_call.1} parent=11 // pred_fallthru
          _
      $region12: #{tpu_custom_call.1} parent=5 // pred_fallthru
        _
      %p412 = scmp.lt.s32.totalorder %s29, 6
      // Predicated region
      $region37: #{tpu_custom_call.1} parent=5 // pred_check
        %p413 = pneg %p412
      $region38: #{tpu_custom_call.1} parent=5 // pred_check_branch
        %415 = sbr.rel (%p413) target = $region40
      $region39: #{tpu_custom_call.1} parent=5 // pred_region
        // Predicated region
        $region41: #{tpu_custom_call.1} parent=39 // pred_check
          %p416 = pneg %p195
        $region42: #{tpu_custom_call.1} parent=39 // pred_check_branch
          %418 = sbr.rel (%p416) target = $region44
        $region43: #{tpu_custom_call.1} parent=39 // pred_region
          %s419 = sand.u32 %s29, 1
          %s420 = scalar_lea.sflag [#allocation10], %s419
          %s421 = sand.u32 %s185, 1
          %s422 = smul.addr %s421, 384
          %s423 = scalar_lea.vmem [#allocation14], %s422
          %s424 = ssub.s32 1, %s36
          %s425 = smul.u32 %s37, %s424
          %s426 = smul.u32 %s36, 2
          %s427 = sadd.s32 %s425, %s426
          %429 = vsyncadd %s420, 0
          %s430 = smul.addr %s427, 48
          %s431 = smul.addr %s430, 8
          %s432 = scalar_lea.hbm %s6, %s431
          %s433 = sshll.u32 %s432, 4
          %s434 = int_to_ptr.hbm [resolvable:$true] %s433
          %s435 = sshll.u32 %s423, 4
          %s436 = int_to_ptr.vmem [resolvable:$true] %s435
          %441 = dma.hbm_to_vmem [thread:$0]  %s434, 6144, %s436, %s420, 384, 384, 24
        $region44: #{tpu_custom_call.1} parent=39 // pred_fallthru
          _
        // Predicated region
        $region45: #{tpu_custom_call.1} parent=39 // pred_check
          %p442 = pneg %p229
        $region46: #{tpu_custom_call.1} parent=39 // pred_check_branch
          %444 = sbr.rel (%p442) target = $region48
        $region47: #{tpu_custom_call.1} parent=39 // pred_region
          %s445 = ssub.s32 1, %s36
          %s446 = smul.u32 %s37, %s445
          %s447 = smul.u32 %s36, 2
          %s448 = sadd.s32 %s446, %s447
          %p449 = scmp.lt.s32.totalorder %s448, 2
          %s450 = scalar_select %p449, %s448, 2
          %s451 = smul.addr %s450, 3
          %s452 = scalar_lea.vmem %s7, %s451
          %s453 = ssub.s32 1, %s36
          %s454 = smul.u32 %s37, %s453
          %s455 = smul.u32 %s36, 2
          %s456 = sadd.s32 %s454, %s455
        $region48: #{tpu_custom_call.1} parent=39 // pred_fallthru
          _
      $region40: #{tpu_custom_call.1} parent=5 // pred_fallthru
        _
      %p457 = scmp.le.s32.totalorder 1, %s29
      %p458 = scmp.lt.s32.totalorder %s29, 7
      %p459 = pnand %p457, %p458
      %p460 = pneg %p459
      // Predicated region
      $region49: #{tpu_custom_call.1} parent=5 // pred_check
        _
      $region50: #{tpu_custom_call.1} parent=5 // pred_check_branch
        %462 = sbr.rel (%p459) target = $region52
      $region51: #{tpu_custom_call.1} parent=5 // pred_region
        %s463 = ssub.s32 %s29, 1
        // Predicated region
        $region53: #{tpu_custom_call.1} parent=51 // pred_check
          %p464 = pneg %p62
        $region54: #{tpu_custom_call.1} parent=51 // pred_check_branch
          %466 = sbr.rel (%p464) target = $region56
        $region55: #{tpu_custom_call.1} parent=51 // pred_region
          %468 = dma.done [#allocation10], 128
        $region56: #{tpu_custom_call.1} parent=51 // pred_fallthru
          _
        // Predicated region
        $region57: #{tpu_custom_call.1} parent=51 // pred_check
          %p469 = pneg %p104
        $region58: #{tpu_custom_call.1} parent=51 // pred_check_branch
          %471 = sbr.rel (%p469) target = $region60
        $region59: #{tpu_custom_call.1} parent=51 // pred_region
          %473 = dma.done [#allocation13], 2048
        $region60: #{tpu_custom_call.1} parent=51 // pred_fallthru
          _
        %s474 = sand.u32 %s34, 1
        %s475 = scalar_lea.sflag [#allocation10], %s474
        %s476 = sand.u32 %s188, 1
        %s477 = smul.addr %s476, 384
        %s478 = scalar_lea.vmem [#allocation14], %s477
        // Predicated region
        $region61: #{tpu_custom_call.1} parent=51 // pred_check
          %p479 = pneg %p201
        $region62: #{tpu_custom_call.1} parent=51 // pred_check_branch
          %481 = sbr.rel (%p479) target = $region64
        $region63: #{tpu_custom_call.1} parent=51 // pred_region
          %483 = dma.done %s475, 6144
        $region64: #{tpu_custom_call.1} parent=51 // pred_fallthru
          _
        %p484 = pneg %p62
        %p485 = pneg %p59
        %p486 = pneg %p83
        %p487 = pneg %p80
        %p488 = pneg %p104
        %p489 = pneg %p101
        %p490 = pneg %p125
        %p491 = pneg %p122
        %p492 = pneg %p146
        %p493 = pneg %p143
        %p494 = pneg %p167
        %p495 = pneg %p164
        %s496 = sand.u32 %s34, 1
        %s497 = scalar_lea.sflag [#allocation10], %s496
        %s498 = sand.u32 %s188, 1
        %s499 = smul.addr %s498, 384
        %s500 = scalar_lea.vmem [#allocation14], %s499
        %p501 = pneg %p201
        %p502 = pneg %p198
        %s503 = ssub.s32 1, %s38
        %s504 = smul.u32 %s39, %s503
        %s505 = smul.u32 %s38, 2
        %s506 = sadd.s32 %s504, %s505
        %p507 = scmp.lt.s32.totalorder %s506, 2
        %s508 = scalar_select %p507, %s506, 2
        %s509 = smul.addr %s508, 3
        %s510 = scalar_lea.vmem %s7, %s509
        %p511 = pneg %p235
        %p512 = pneg %p232
        %p513 = pneg %p263
        %p514 = pneg %p260
        %s515 = sand.u32 %s250, 1
        %s516 = scalar_lea.sflag [#allocation11], %s515
        %s517 = sand.u32 %s250, 1
        %s518 = smul.addr %s517, 8
        %s519 = scalar_lea.vmem [#allocation15], %s518
        %p520 = pneg %p291
        %p521 = pneg %p288
        %s522 = sand.u32 %s34, 1
        %s523 = scalar_lea.sflag [#allocation17], %s522
        %s524 = sand.u32 %s278, 1
        %s525 = smul.addr %s524, 8
        %s526 = scalar_lea.vmem [#allocation16], %s525
        %p527 = pneg %p325
        %p528 = pneg %p322
        %s529 = sand.u32 %s34, 1
        %s530 = scalar_lea.sflag [#allocation17], %s529
        %s531 = sand.u32 %s312, 1
        %s532 = smul.addr %s531, 8
        %s533 = scalar_lea.vmem [#allocation18], %s532
        %p534 = pneg %p359
        %p535 = pneg %p356
        %s536 = sand.u32 %s346, 1
        %s537 = scalar_lea.sflag [#allocation20], %s536
        %s538 = sand.u32 %s346, 1
        %s539 = smul.addr %s538, 8
        %s540 = scalar_lea.vmem [#allocation19], %s539
        %s541 = ssub.s32 1, %s38
        %s542 = smul.u32 %s39, %s541
        %s543 = smul.u32 %s38, 2
        %s544 = sadd.s32 %s542, %s543
        %s545 = ssub.s32 1, %s38
        %s546 = smul.u32 %s39, %s545
        %s547 = smul.u32 %s38, 2
        %s548 = sadd.s32 %s546, %s547
        %p549 = scmp.lt.s32.totalorder %s548, 2
        %s550 = scalar_select %p549, %s548, 2
        %s551 = smul.addr %s550, 3
        %s552 = scalar_lea.vmem %s7, %s551
        %s553 = ssub.s32 1, %s38
        %s554 = smul.u32 %s39, %s553
        %s555 = smul.u32 %s38, 2
        %s556 = sadd.s32 %s554, %s555
        %s557 = smul.u32 %s39, %s38
        %s558 = smul.u32 %s39, %s38
        %s559 = ssub.s32 1, %s38
        %s560 = smul.u32 %s39, %s559
        %s561 = smul.u32 %s38, 2
        %s562 = sadd.s32 %s560, %s561
        %s563 = ssub.s32 1, %s38
        %s564 = smul.u32 %s39, %s563
        %s565 = smul.u32 %s38, 2
        %s566 = sadd.s32 %s564, %s565
        %p567 = scmp.eq.s32.totalorder %s38, 0
        %p568 = scmp.eq.s32.totalorder %s39, 0
        %p569 = pnand %p567, %p568
        %p570 = pneg %p569
        // Predicated region
        $region65: #{tpu_custom_call.1} parent=51 // pred_check
          _
        $region66: #{tpu_custom_call.1} parent=51 // pred_check_branch
          %572 = sbr.rel (%p569) target = $region68
        $region67: #{tpu_custom_call.1} parent=51 // pred_region
          %v573 = vld [vmem:[#allocation9] sm:$0xff]
          %v574 = vld [vmem:[#allocation12] sm:$0xff]
          %v575 = vld [vmem:[#allocation12 + $0x8] sm:$0xff]
          %v576 = vld [vmem:[#allocation12 + $0x10] sm:$0xff]
          %v577 = vld [vmem:[#allocation12 + $0x18] sm:$0xff]
          %v578 = vld [vmem:[#allocation12 + $0x20] sm:$0xff]
          %v579 = vld [vmem:[#allocation12 + $0x28] sm:$0xff]
          %v580 = vld [vmem:[#allocation12 + $0x30] sm:$0xff]
          %v581 = vld [vmem:[#allocation12 + $0x38] sm:$0xff]
          %v582 = vld [vmem:[#allocation12 + $0x40] sm:$0xff]
          %v583 = vld [vmem:[#allocation12 + $0x48] sm:$0xff]
          %v584 = vld [vmem:[#allocation12 + $0x50] sm:$0xff]
          %v585 = vld [vmem:[#allocation12 + $0x58] sm:$0xff]
          %v586 = vld [vmem:[#allocation12 + $0x60] sm:$0xff]
          %v587 = vld [vmem:[#allocation12 + $0x68] sm:$0xff]
          %v588 = vld [vmem:[#allocation12 + $0x70] sm:$0xff]
          %v589 = vld [vmem:[#allocation12 + $0x78] sm:$0xff]
          %v590 = vld [vmem:[%s3] sm:$0x1]
          %v592 = vperm.slane %v590, 0
          %594 = vmatpush.msra.mxu0 %v589
          %595 = vmatpush.msra.mxu0 %v588
          %596 = vmatpush.msra.mxu0 %v587
          %597 = vmatpush.msra.mxu0 %v586
          %598 = vmatpush.msra.mxu0 %v585
          %599 = vmatpush.msra.mxu0 %v584
          %600 = vmatpush.msra.mxu0 %v583
          %601 = vmatpush.msra.mxu0 %v582
          %602 = vmatpush.msra.mxu0 %v581
          %603 = vmatpush.msra.mxu0 %v580
          %604 = vmatpush.msra.mxu0 %v579
          %605 = vmatpush.msra.mxu0 %v578
          %606 = vmatpush.msra.mxu0 %v577
          %607 = vmatpush.msra.mxu0 %v576
          %608 = vmatpush.msra.mxu0 %v575
          %609 = vmatpush.msra.mxu0 %v574
          %610 = vmatmul.f32.gmra.mxu0 %v573
          %v611 = vpop.f32.mrf.mxu0
          %v612 = vadd.f32 %v592, %v611
          %613 = vdwg.mxu0
          %v614 = vrot.slane %v612, 4
          %v615 = vadd.f32 %v612, %v614
          %v616 = vrot.slane %v615, 2
          %v617 = vadd.f32 %v615, %v616
          %v618 = vrot.slane %v617, 1
          %v619 = vadd.f32 %v617, %v618
          %v620 = vrcp.pop 8.0
          %v621 = vmul.f32 8.0, %v620
          %v622 = vsub.f32 1.0, %v621
          %v623 = vmul.f32 %v620, %v622
          %v624 = vadd.f32 %v620, %v623
          %vm625 = vweird.f32 %v620
          %v626 = vsel %vm625, %v620, %v624
          %v627 = vmul.f32 %v619, %v626
          %v628 = vsub.f32 %v612, %v627
          %v629 = vmul.f32 %v628, %v628
          %v630 = vrot.slane %v629, 4
          %v631 = vadd.f32 %v629, %v630
          %v632 = vrot.slane %v631, 2
          %v633 = vadd.f32 %v631, %v632
          %v634 = vrot.slane %v633, 1
          %v635 = vadd.f32 %v633, %v634
          %v636 = vmul.f32 %v635, %v626
          %v637 = vld [vmem:[%s4] sm:$0x1]
          %v638 = vadd.f32 %v636, 0.001
          %v639 = vrsqrt.pop %v638
          %v640 = vmul.f32 %v639, %v638
          %v641 = vmul.f32 %v640, %v639
          %v642 = vmul.f32 0.5, %v641
          %v643 = vsub.f32 1.5, %v642
          %v644 = vmul.f32 %v639, %v643
          %vm645 = vweird.f32 %v638
          %vm646 = vweird.f32 %v639
          %vm647 = vmor %vm645, %vm646
          %v648 = vsel %vm647, %v639, %v644
          %v649 = vmul.f32 %v637, %v648
          %v650 = vld [vmem:[%s5] sm:$0x1]
          %v651 = vmul.f32 %v627, %v649
          %v652 = vsub.f32 %v650, %v651
          %v654 = vperm.slane %v649, 0
          %v656 = vmul.f32 %v612, %v654
          %v658 = vperm.slane %v652, 0
          %v660 = vadd.f32 %v656, %v658
          %v661 = vmax.f32 %v660, 0.0
          %662 = vst [vmem:[#allocation2] sm:$0xff] %v661
          %vm663 = vcmask 7168
          %664 = vst.msk [vmem:[#allocation3] sm:$0xff] %vm663, -inf
          %665 = vst.msk [vmem:[#allocation4] sm:$0xff] %vm663, 0.0
        $region68: #{tpu_custom_call.1} parent=51 // pred_fallthru
          _
        // Predicated region
        $region69: #{tpu_custom_call.1} parent=51 // pred_check
          %p666 = pneg %p567
        $region70: #{tpu_custom_call.1} parent=51 // pred_check_branch
          %668 = sbr.rel (%p666) target = $region72
        $region71: #{tpu_custom_call.1} parent=51 // pred_region
          %v669 = vld [vmem:[#allocation2] sm:$0xff]
          %v670 = vld [vmem:[%s478] sm:$0xff]
          %v671 = vld [vmem:[%s478 + $0x8] sm:$0xff]
          %v672 = vld [vmem:[%s478 + $0x10] sm:$0xff]
          %v673 = vld [vmem:[%s478 + $0x18] sm:$0xff]
          %v674 = vld [vmem:[%s478 + $0x20] sm:$0xff]
          %v675 = vld [vmem:[%s478 + $0x28] sm:$0xff]
          %v676 = vld [vmem:[%s478 + $0x30] sm:$0xff]
          %v677 = vld [vmem:[%s478 + $0x38] sm:$0xff]
          %v678 = vld [vmem:[%s478 + $0x40] sm:$0xff]
          %v679 = vld [vmem:[%s478 + $0x48] sm:$0xff]
          %v680 = vld [vmem:[%s478 + $0x50] sm:$0xff]
          %v681 = vld [vmem:[%s478 + $0x58] sm:$0xff]
          %v682 = vld [vmem:[%s478 + $0x60] sm:$0xff]
          %v683 = vld [vmem:[%s478 + $0x68] sm:$0xff]
          %v684 = vld [vmem:[%s478 + $0x70] sm:$0xff]
          %v685 = vld [vmem:[%s478 + $0x78] sm:$0xff]
          %v686 = vld [vmem:[%s478 + $0x80] sm:$0xff]
          %v687 = vld [vmem:[%s478 + $0x88] sm:$0xff]
          %v688 = vld [vmem:[%s478 + $0x90] sm:$0xff]
          %v689 = vld [vmem:[%s478 + $0x98] sm:$0xff]
          %v690 = vld [vmem:[%s478 + $0xa0] sm:$0xff]
          %v691 = vld [vmem:[%s478 + $0xa8] sm:$0xff]
          %v692 = vld [vmem:[%s478 + $0xb0] sm:$0xff]
          %v693 = vld [vmem:[%s478 + $0xb8] sm:$0xff]
          %v694 = vld [vmem:[%s478 + $0xc0] sm:$0xff]
          %v695 = vld [vmem:[%s478 + $0xc8] sm:$0xff]
          %v696 = vld [vmem:[%s478 + $0xd0] sm:$0xff]
          %v697 = vld [vmem:[%s478 + $0xd8] sm:$0xff]
          %v698 = vld [vmem:[%s478 + $0xe0] sm:$0xff]
          %v699 = vld [vmem:[%s478 + $0xe8] sm:$0xff]
          %v700 = vld [vmem:[%s478 + $0xf0] sm:$0xff]
          %v701 = vld [vmem:[%s478 + $0xf8] sm:$0xff]
          %v702 = vld [vmem:[%s478 + $0x100] sm:$0xff]
          %v703 = vld [vmem:[%s478 + $0x108] sm:$0xff]
          %v704 = vld [vmem:[%s478 + $0x110] sm:$0xff]
          %v705 = vld [vmem:[%s478 + $0x118] sm:$0xff]
          %v706 = vld [vmem:[%s478 + $0x120] sm:$0xff]
          %v707 = vld [vmem:[%s478 + $0x128] sm:$0xff]
          %v708 = vld [vmem:[%s478 + $0x130] sm:$0xff]
          %v709 = vld [vmem:[%s478 + $0x138] sm:$0xff]
          %v710 = vld [vmem:[%s478 + $0x140] sm:$0xff]
          %v711 = vld [vmem:[%s478 + $0x148] sm:$0xff]
          %v712 = vld [vmem:[%s478 + $0x150] sm:$0xff]
          %v713 = vld [vmem:[%s478 + $0x158] sm:$0xff]
          %v714 = vld [vmem:[%s478 + $0x160] sm:$0xff]
          %v715 = vld [vmem:[%s478 + $0x168] sm:$0xff]
          %v716 = vld [vmem:[%s478 + $0x170] sm:$0xff]
          %v717 = vld [vmem:[%s478 + $0x178] sm:$0xff]
          %v718 = vld [vmem:[%s552] sm:$0x7]
          %v720 = vperm.slane %v718, 0
          %v721 = vperm.slane %v718, 1
          %v722 = vperm.slane %v718, 2
          %726 = vmatpush.msra.mxu0 %v715
          %727 = vmatpush.msra.mxu0 %v712
          %728 = vmatpush.msra.mxu0 %v709
          %729 = vmatpush.msra.mxu0 %v706
          %730 = vmatpush.msra.mxu0 %v703
          %731 = vmatpush.msra.mxu0 %v700
          %732 = vmatpush.msra.mxu0 %v697
          %733 = vmatpush.msra.mxu0 %v694
          %734 = vmatpush.msra.mxu0 %v691
          %735 = vmatpush.msra.mxu0 %v688
          %736 = vmatpush.msra.mxu0 %v685
          %737 = vmatpush.msra.mxu0 %v682
          %738 = vmatpush.msra.mxu0 %v679
          %739 = vmatpush.msra.mxu0 %v676
          %740 = vmatpush.msra.mxu0 %v673
          %741 = vmatpush.msra.mxu0 %v670
          %742 = vmatmul.f32.gmra.mxu0 %v669
          %v743 = vpop.f32.mrf.mxu0
          %v744 = vadd.f32 %v720, %v743
          %745 = vdwg.mxu0
          %746 = vmatpush.msra.mxu0 %v716
          %747 = vmatpush.msra.mxu0 %v713
          %748 = vmatpush.msra.mxu0 %v710
          %749 = vmatpush.msra.mxu0 %v707
          %750 = vmatpush.msra.mxu0 %v704
          %751 = vmatpush.msra.mxu0 %v701
          %752 = vmatpush.msra.mxu0 %v698
          %753 = vmatpush.msra.mxu0 %v695
          %754 = vmatpush.msra.mxu0 %v692
          %755 = vmatpush.msra.mxu0 %v689
          %756 = vmatpush.msra.mxu0 %v686
          %757 = vmatpush.msra.mxu0 %v683
          %758 = vmatpush.msra.mxu0 %v680
          %759 = vmatpush.msra.mxu0 %v677
          %760 = vmatpush.msra.mxu0 %v674
          %761 = vmatpush.msra.mxu0 %v671
          %762 = vmatmul.f32.gmra.mxu0 %v669
          %v763 = vpop.f32.mrf.mxu0
          %v764 = vadd.f32 %v721, %v763
          %765 = vdwg.mxu0
          %766 = vmatpush.msra.mxu0 %v717
          %767 = vmatpush.msra.mxu0 %v714
          %768 = vmatpush.msra.mxu0 %v711
          %769 = vmatpush.msra.mxu0 %v708
          %770 = vmatpush.msra.mxu0 %v705
          %771 = vmatpush.msra.mxu0 %v702
          %772 = vmatpush.msra.mxu0 %v699
          %773 = vmatpush.msra.mxu0 %v696
          %774 = vmatpush.msra.mxu0 %v693
          %775 = vmatpush.msra.mxu0 %v690
          %776 = vmatpush.msra.mxu0 %v687
          %777 = vmatpush.msra.mxu0 %v684
          %778 = vmatpush.msra.mxu0 %v681
          %779 = vmatpush.msra.mxu0 %v678
          %780 = vmatpush.msra.mxu0 %v675
          %781 = vmatpush.msra.mxu0 %v672
          %782 = vmatmul.f32.gmra.mxu0 %v669
          %v783 = vpop.f32.mrf.mxu0
          %v784 = vadd.f32 %v722, %v783
          %785 = vdwg.mxu0
          %786 = vst [vmem:[%s540] sm:$0xff] %v764
          %787 = vst [vmem:[%s533] sm:$0xff] %v784
          %v788 = vld [vmem:[#allocation3] sm:$0xff]
          %789 = vmax.xlane.f32.xlu0 %v744
          %v790 = vpop.xlane.xlu0 %789
          %v791 = vmax.f32 %v788, %v790
          %793 = vset.pattern.permute.xlu0 0
          %794 = vperm.xlu0 %793, %v791
          %v795 = vpop.permute.xlu0 %794
          %v797 = vsub.f32 %v744, %v795
          %v798 = vmul.f32 %v797, 1.442695
          %v799 = vpow.pop %v798
          %s800 = smul.u32 %s39, 8
          %s801 = scalar_lea.vmem [#allocation8], %s800
          %802 = vst [vmem:[%s801] sm:$0xff] %v799
          %s803 = scalar_lea.vmem [#allocation7], %s800
          %vm804 = vcmask 7168
          %805 = vst.msk [vmem:[%s803] sm:$0xff] %vm804, %v791
          %v806 = vld [vmem:[#allocation4] sm:$0xff]
          %v807 = vld [vmem:[#allocation3] sm:$0xff]
          %v808 = vsub.f32 %v807, %v791
          %v809 = vmul.f32 %v808, 1.442695
          %v810 = vpow.pop %v809
          %v811 = vmul.f32 %v806, %v810
          %812 = vadd.xlane.f32.xlu0 %v799
          %v813 = vpop.xlane.xlu0 %812
          %v814 = vadd.f32 %v811, %v813
          %815 = vst.msk [vmem:[#allocation4] sm:$0xff] %vm804, %v814
          %816 = vst.msk [vmem:[#allocation3] sm:$0xff] %vm804, %v791
        $region72: #{tpu_custom_call.1} parent=51 // pred_fallthru
          _
        %p817 = scmp.eq.s32.totalorder %s38, 1
        %p818 = pnand %p817, %p568
        %p819 = pneg %p818
        // Predicated region
        $region73: #{tpu_custom_call.1} parent=51 // pred_check
          _
        $region74: #{tpu_custom_call.1} parent=51 // pred_check_branch
          %821 = sbr.rel (%p818) target = $region76
        $region75: #{tpu_custom_call.1} parent=51 // pred_region
          %v822 = vld [vmem:[#allocation4] sm:$0xff]
          %v823 = vrcp.pop %v822
          %v824 = vmul.f32 %v822, %v823
          %v825 = vsub.f32 1.0, %v824
          %v826 = vmul.f32 %v823, %v825
          %v827 = vadd.f32 %v823, %v826
          %vm828 = vweird.f32 %v822
          %vm829 = vweird.f32 %v823
          %vm830 = vmor %vm828, %vm829
          %v831 = vsel %vm830, %v823, %v827
          %v832 = vand.u32 2147483647, %v822
          %vm833 = vcmp.eq.f32.partialorder %v832, 8.507059e+37
          %v834 = vand.u32 %v822, 2147483648
          %v835 = vor.u32 1.1754944e-38, %v834
          %v836 = vsel %vm833, %v835, %v831
          %vm837 = vcmask 7168
          %838 = vst.msk [vmem:[#allocation5] sm:$0xff] %vm837, %v836
          %v839 = vld [vmem:[%s1] sm:$0xff]
          %v840 = vmin.f32 %v839, 12.0
          %v841 = vmul.f32 %v840, 1.442695
          %v842 = vpow.pop %v841
          %v843 = vmul.f32 %v842, %v836
          %844 = vst.msk [vmem:[#allocation6] sm:$0xff] %vm837, %v843
        $region76: #{tpu_custom_call.1} parent=51 // pred_fallthru
          _
        // Predicated region
        $region77: #{tpu_custom_call.1} parent=51 // pred_check
          %p845 = pneg %p817
        $region78: #{tpu_custom_call.1} parent=51 // pred_check_branch
          %847 = sbr.rel (%p845) target = $region80
        $region79: #{tpu_custom_call.1} parent=51 // pred_region
          %s848 = smul.u32 %s39, 8
          %s849 = scalar_lea.vmem [#allocation7], %s848
          %v850 = vld [vmem:[%s849] sm:$0xff]
          %v851 = vld [vmem:[#allocation3] sm:$0xff]
          %v852 = vsub.f32 %v850, %v851
          %v853 = vmul.f32 %v852, 1.442695
          %v854 = vpow.pop %v853
          %s855 = scalar_lea.vmem [#allocation8], %s848
          %v856 = vld [vmem:[%s855] sm:$0xff]
          %v857 = vld [vmem:[#allocation5] sm:$0xff]
          %v858 = vmul.f32 %v854, %v857
          %860 = vset.pattern.permute.xlu0 0
          %861 = vperm.xlu0 %860, %v858
          %v862 = vpop.permute.xlu0 %861
          %v864 = vmul.f32 %v856, %v862
          %865 = vst [vmem:[%s519] sm:$0xff] %v864
          %v866 = vld [vmem:[#allocation6] sm:$0xff]
          %v867 = vmul.f32 %v854, %v866
          %869 = vset.pattern.permute.xlu0 0
          %870 = vperm.xlu0 %869, %v867
          %v871 = vpop.permute.xlu0 %870
          %v873 = vmul.f32 %v856, %v871
          %874 = vst [vmem:[%s526] sm:$0xff] %v873
        $region80: #{tpu_custom_call.1} parent=51 // pred_fallthru
          _
        %s875 = sand.u32 %s250, 1
        %s876 = scalar_lea.sflag [#allocation11], %s875
        %s877 = sand.u32 %s250, 1
        %s878 = smul.addr %s877, 8
        %s879 = scalar_lea.vmem [#allocation15], %s878
        %s880 = sand.u32 %s34, 1
        %s881 = scalar_lea.sflag [#allocation17], %s880
        %s882 = sand.u32 %s278, 1
        %s883 = smul.addr %s882, 8
        %s884 = scalar_lea.vmem [#allocation16], %s883
        %s885 = sand.u32 %s34, 1
        %s886 = scalar_lea.sflag [#allocation17], %s885
        %s887 = sand.u32 %s312, 1
        %s888 = smul.addr %s887, 8
        %s889 = scalar_lea.vmem [#allocation18], %s888
        %s890 = sand.u32 %s346, 1
        %s891 = scalar_lea.sflag [#allocation20], %s890
        %s892 = sand.u32 %s346, 1
        %s893 = smul.addr %s892, 8
        %s894 = scalar_lea.vmem [#allocation19], %s893
        // Predicated region
        $region81: #{tpu_custom_call.1} parent=51 // pred_check
          %p895 = pneg %p260
        $region82: #{tpu_custom_call.1} parent=51 // pred_check_branch
          %897 = sbr.rel (%p895) target = $region84
        $region83: #{tpu_custom_call.1} parent=51 // pred_region
          %s898 = smul.u32 %s39, %s38
          %900 = vsyncadd %s876, 0
          %s901 = smul.addr %s898, 8
          %s902 = scalar_lea.hbm %s8, %s901
          %s904 = sshll.u32 %s879, 4
          %s905 = int_to_ptr.vmem [resolvable:$true] %s904
          %s906 = sshll.u32 %s902, 4
          %s907 = int_to_ptr.hbm [resolvable:$true] %s906
          %909 = dma.vmem_to_hbm [thread:$0]  %s905, 128, %s907, %s876
        $region84: #{tpu_custom_call.1} parent=51 // pred_fallthru
          _
        // Predicated region
        $region85: #{tpu_custom_call.1} parent=51 // pred_check
          %p910 = pneg %p288
        $region86: #{tpu_custom_call.1} parent=51 // pred_check_branch
          %912 = sbr.rel (%p910) target = $region88
        $region87: #{tpu_custom_call.1} parent=51 // pred_region
          %s913 = smul.u32 %s39, %s38
          %915 = vsyncadd %s881, 0
          %s916 = smul.addr %s913, 8
          %s917 = scalar_lea.hbm %s9, %s916
          %s919 = sshll.u32 %s884, 4
          %s920 = int_to_ptr.vmem [resolvable:$true] %s919
          %s921 = sshll.u32 %s917, 4
          %s922 = int_to_ptr.hbm [resolvable:$true] %s921
          %924 = dma.vmem_to_hbm [thread:$0]  %s920, 128, %s922, %s881
        $region88: #{tpu_custom_call.1} parent=51 // pred_fallthru
          _
        // Predicated region
        $region89: #{tpu_custom_call.1} parent=51 // pred_check
          %p925 = pneg %p322
        $region90: #{tpu_custom_call.1} parent=51 // pred_check_branch
          %927 = sbr.rel (%p925) target = $region92
        $region91: #{tpu_custom_call.1} parent=51 // pred_region
          %s928 = ssub.s32 1, %s38
          %s929 = smul.u32 %s39, %s928
          %s930 = smul.u32 %s38, 2
          %s931 = sadd.s32 %s929, %s930
          %933 = vsyncadd %s886, 0
          %s934 = smul.addr %s931, 8
          %s935 = scalar_lea.hbm %s10, %s934
          %s937 = sshll.u32 %s889, 4
          %s938 = int_to_ptr.vmem [resolvable:$true] %s937
          %s939 = sshll.u32 %s935, 4
          %s940 = int_to_ptr.hbm [resolvable:$true] %s939
          %942 = dma.vmem_to_hbm [thread:$0]  %s938, 128, %s940, %s886
        $region92: #{tpu_custom_call.1} parent=51 // pred_fallthru
          _
        // Predicated region
        $region93: #{tpu_custom_call.1} parent=51 // pred_check
          %p943 = pneg %p356
        $region94: #{tpu_custom_call.1} parent=51 // pred_check_branch
          %945 = sbr.rel (%p943) target = $region96
        $region95: #{tpu_custom_call.1} parent=51 // pred_region
          %s946 = ssub.s32 1, %s38
          %s947 = smul.u32 %s39, %s946
          %s948 = smul.u32 %s38, 2
          %s949 = sadd.s32 %s947, %s948
          %951 = vsyncadd %s891, 0
          %s952 = smul.addr %s949, 8
          %s953 = scalar_lea.hbm %s11, %s952
          %s955 = sshll.u32 %s894, 4
          %s956 = int_to_ptr.vmem [resolvable:$true] %s955
          %s957 = sshll.u32 %s953, 4
          %s958 = int_to_ptr.hbm [resolvable:$true] %s957
          %960 = dma.vmem_to_hbm [thread:$0]  %s956, 128, %s958, %s891
        $region96: #{tpu_custom_call.1} parent=51 // pred_fallthru
          _
      $region52: #{tpu_custom_call.1} parent=5 // pred_fallthru
        _
      %p961 = scmp.le.s32.totalorder 2, %s29
      // Predicated region
      $region97: #{tpu_custom_call.1} parent=5 // pred_check
        %p962 = pneg %p961
      $region98: #{tpu_custom_call.1} parent=5 // pred_check_branch
        %964 = sbr.rel (%p962) target = $region100
      $region99: #{tpu_custom_call.1} parent=5 // pred_region
        %s965 = ssub.s32 %s29, 2
        // Predicated region
        $region101: #{tpu_custom_call.1} parent=99 // pred_check
          %p966 = pneg %p266
        $region102: #{tpu_custom_call.1} parent=99 // pred_check_branch
          %968 = sbr.rel (%p966) target = $region104
        $region103: #{tpu_custom_call.1} parent=99 // pred_region
          %s969 = sand.u32 %s251, 1
          %s970 = scalar_lea.sflag [#allocation11], %s969
          %s971 = sand.u32 %s251, 1
          %s972 = smul.addr %s971, 8
          %s973 = scalar_lea.vmem [#allocation15], %s972
          %975 = dma.done %s970, 128
        $region104: #{tpu_custom_call.1} parent=99 // pred_fallthru
          _
        // Predicated region
        $region105: #{tpu_custom_call.1} parent=99 // pred_check
          %p976 = pneg %p294
        $region106: #{tpu_custom_call.1} parent=99 // pred_check_branch
          %978 = sbr.rel (%p976) target = $region108
        $region107: #{tpu_custom_call.1} parent=99 // pred_region
          %s979 = sand.u32 %s35, 1
          %s980 = scalar_lea.sflag [#allocation17], %s979
          %s981 = sand.u32 %s279, 1
          %s982 = smul.addr %s981, 8
          %s983 = scalar_lea.vmem [#allocation16], %s982
          %985 = dma.done %s980, 128
        $region108: #{tpu_custom_call.1} parent=99 // pred_fallthru
          _
        // Predicated region
        $region109: #{tpu_custom_call.1} parent=99 // pred_check
          %p986 = pneg %p328
        $region110: #{tpu_custom_call.1} parent=99 // pred_check_branch
          %988 = sbr.rel (%p986) target = $region112
        $region111: #{tpu_custom_call.1} parent=99 // pred_region
          %s989 = sand.u32 %s35, 1
          %s990 = scalar_lea.sflag [#allocation17], %s989
          %s991 = sand.u32 %s313, 1
          %s992 = smul.addr %s991, 8
          %s993 = scalar_lea.vmem [#allocation18], %s992
          %995 = dma.done %s990, 128
        $region112: #{tpu_custom_call.1} parent=99 // pred_fallthru
          _
        // Predicated region
        $region113: #{tpu_custom_call.1} parent=99 // pred_check
          %p996 = pneg %p362
        $region114: #{tpu_custom_call.1} parent=99 // pred_check_branch
          %998 = sbr.rel (%p996) target = $region116
        $region115: #{tpu_custom_call.1} parent=99 // pred_region
          %s999 = sand.u32 %s347, 1
          %s1000 = scalar_lea.sflag [#allocation20], %s999
          %s1001 = sand.u32 %s347, 1
          %s1002 = smul.addr %s1001, 8
          %s1003 = scalar_lea.vmem [#allocation19], %s1002
          %1005 = dma.done %s1000, 128
        $region116: #{tpu_custom_call.1} parent=99 // pred_fallthru
          _
      $region100: #{tpu_custom_call.1} parent=5 // pred_fallthru
        _
    $region6: #{tpu_custom_call.1} parent=1 // loop_footer
      %s33 = sadd.s32 1, %s29
    $region7: #{tpu_custom_call.1} parent=1 // loop_footer_branch
      %28 = sbr.rel target = $region3
    $region8: #{tpu_custom_call.1} parent=1 // loop_exit
      _
    %1006 = vsyncpa [#allocation10], 1
    %s1007 = scalar_lea.sflag [#allocation10], 1
    %1008 = vsyncpa %s1007, 1
    %1009 = vsyncpa [#allocation13], 1
    %1010 = vsyncpa [#allocation11], 1
    %s1011 = scalar_lea.sflag [#allocation11], 1
    %1012 = vsyncpa %s1011, 1
    %1013 = vsyncpa [#allocation17], 1
    %s1014 = scalar_lea.sflag [#allocation17], 1
    %1015 = vsyncpa %s1014, 1
    %1016 = vsyncpa [#allocation20], 1
    %s1017 = scalar_lea.sflag [#allocation20], 1
    %1018 = vsyncpa %s1017, 1

</llo_original>
